<compile_context>
chip_gen: v5e
topology: v5e:2x2
jax: 0.10.0
libtpu: 0.0.40
codegen_flags: <defaults>
</compile_context>

<pallas_src>
import functools

import jax
import jax.numpy as jnp
from jax import lax
from jax.experimental import pallas as pl
from jax.experimental.pallas import tpu as pltpu

# ----- hyperparameters implied by the module constructor (synthetic sizes) -----
VOCAB      = 64          # embedding vocabulary
EMB_SIZE   = 32          # EmbSize
BILSTM_IN  = 32          # BiLSTMInputSize (== Encoder output width)
H          = 32          # BiLSTMHiddenSize
G          = 4 * H       # gates per direction (i,f,g,o)
DNN_IN     = 2 * H       # DNNInputSize (concat fwd/bwd final hidden)
DNN_HIDDEN = 64          # DNNHiddenSize
N_CLASSES  = 5           # FiveClassify
OUT_PAD    = 128         # lane-dense padded logit width (first 5 lanes real)
SUBLANE    = 8           # batch padded to a multiple of this
# BiLSTMDropout / DNNDropout: identity at inference (no-op here).


def _encoder_bilstm_dnn_kernel(
    ids_ref,                 # [S*Bp, 1]  int32 token ids (time-major flattened)
    emb_ref,                 # [VOCAB, EMB_SIZE]        bf16
    enc_w_ref, enc_b_ref,    # [EMB_SIZE, BILSTM_IN] bf16, [1, BILSTM_IN] f32
    wih_ref, bih_ref,        # [BILSTM_IN, 2G] bf16 (fwd|bwd, g cols x2), [1, 2G] f32
    whh_ref,                 # [2H, 2G] bf16 block-diagonal (g cols x2)
    w1_ref, b1_ref,          # [2H, DNN_HIDDEN] bf16, [1, DNN_HIDDEN] f32
    w2p_ref, b2p_ref,        # [DNN_HIDDEN, OUT_PAD] bf16 (padded), [1, OUT_PAD] f32
    out_ref,                 # [Bp, OUT_PAD] f32
    *, S, Bp,
):
    SB = S * Bp

    # ---------- Embedding: in-kernel gather via one-hot matmul ----------
    ids = ids_ref[...]                                            # [SB, 1]
    iota = lax.broadcasted_iota(jnp.int32, (SB, VOCAB), 1)
    onehot = (ids == iota).astype(jnp.bfloat16)                   # [SB, VOCAB]
    emb = jnp.dot(onehot, emb_ref[...],
                  preferred_element_type=jnp.float32)             # [SB, EMB]

    # ---------- Encoder: affine + tanh ----------
    enc = jnp.tanh(
        jnp.dot(emb.astype(jnp.bfloat16), enc_w_ref[...],
                preferred_element_type=jnp.float32) + enc_b_ref[...])   # [SB, 32]

    # ---------- Hoisted input-to-hidden projections (both directions, one dot) ----------
    gx = (jnp.dot(enc.astype(jnp.bfloat16), wih_ref[...],
                  preferred_element_type=jnp.float32) + bih_ref[...])   # [SB, 2G]

    whh = whh_ref[...]                                            # [2H, 2G] bf16

    def cell(s, c):
        # g-gate pre-activations were scaled by 2 at init, so tanh(x) = 2*sigmoid(2x)-1
        c_new = s[:, H:2 * H] * c + s[:, 0:H] * (2.0 * s[:, 2 * H:3 * H] - 1.0)
        h_new = s[:, 3 * H:4 * H] * jnp.tanh(c_new)
        return h_new, c_new

    def gx_at(t):
        rf = t * Bp                    # forward reads time t
        rb = (S - 1 - t) * Bp          # backward reads time S-1-t
        return gx[rf:rf + Bp, 0:G], gx[rb:rb + Bp, G:2 * G]

    # ---------- BiLSTM: fused fwd/bwd recurrence, fully unrolled ----------
    # Step 0: h = c = 0 so the recurrent matmul contributes nothing.
    gxf, gxb = gx_at(0)
    s_f = jax.nn.sigmoid(gxf)
    s_b = jax.nn.sigmoid(gxb)
    zero = jnp.zeros((Bp, H), jnp.float32)
    h_f, c_f = cell(s_f, zero)
    h_b, c_b = cell(s_b, zero)
    hcat = jnp.concatenate([h_f, h_b], axis=-1).astype(jnp.bfloat16)    # [Bp, 2H]

    for t in range(1, S):
        res = jnp.dot(hcat, whh, preferred_element_type=jnp.float32)    # [Bp, 2G]
        gxf, gxb = gx_at(t)
        s_f = jax.nn.sigmoid(res[:, 0:G] + gxf)
        s_b = jax.nn.sigmoid(res[:, G:2 * G] + gxb)
        h_f, c_f = cell(s_f, c_f)
        h_b, c_b = cell(s_b, c_b)
        hcat = jnp.concatenate([h_f, h_b], axis=-1).astype(jnp.bfloat16)

    # ---------- DNN head: Linear -> ReLU -> Linear (lane-dense padded output) ----------
    hid = (jnp.dot(hcat, w1_ref[...], preferred_element_type=jnp.float32)
           + b1_ref[...])
    hid = jnp.maximum(hid, 0.0)
    out_ref[...] = (jnp.dot(hid.astype(jnp.bfloat16), w2p_ref[...],
                            preferred_element_type=jnp.float32) + b2p_ref[...])


@jax.jit
def encoder_bilstm_dnn_forward(x_ids, kp):
    """x_ids: [B, S] int32 token ids -> logits [B, 5] float32."""
    B, S = x_ids.shape
    Bp = max(SUBLANE, pl.cdiv(B, SUBLANE) * SUBLANE)

    # Pad batch to a sublane multiple; padded rows are discarded after the kernel.
    x_pad = jnp.pad(x_ids, ((0, Bp - B), (0, 0)))
    # Time-major flattened id column for the in-kernel one-hot gather.
    ids_tm = x_pad.T.reshape(S * Bp, 1).astype(jnp.int32)

    vmem = pl.BlockSpec(memory_space=pltpu.MemorySpace.VMEM)
    args = (ids_tm,
            kp["emb"], kp["enc_w"], kp["enc_b"],
            kp["wih"], kp["bih"], kp["whh"],
            kp["w1"], kp["b1"], kp["w2p"], kp["b2p"])

    out_padded = pl.pallas_call(
        functools.partial(_encoder_bilstm_dnn_kernel, S=S, Bp=Bp),
        out_shape=jax.ShapeDtypeStruct((Bp, OUT_PAD), jnp.float32),
        in_specs=[vmem] * len(args),
        out_specs=vmem,
    )(*args)
    return out_padded[:B, :N_CLASSES]


def init_raw_params(key):
    """Raw (PyTorch-layout) weights."""
    ks = jax.random.split(key, 13)

    def w(k, shape, scale=0.1):
        return (scale * jax.random.normal(k, shape)).astype(jnp.float32)

    return dict(
        emb_table=w(ks[0], (VOCAB, EMB_SIZE)),
        enc_w=w(ks[1], (EMB_SIZE, BILSTM_IN)),
        enc_b=w(ks[2], (1, BILSTM_IN)),
        wih_f=w(ks[3], (BILSTM_IN, G)),
        whh_f=w(ks[4], (H, G)),
        b_f=w(ks[5], (1, G)),
        wih_b=w(ks[6], (BILSTM_IN, G)),
        whh_b=w(ks[7], (H, G)),
        b_b=w(ks[8], (1, G)),
        w1=w(ks[9], (DNN_IN, DNN_HIDDEN)),
        b1=w(ks[10], (1, DNN_HIDDEN)),
        w2=w(ks[11], (DNN_HIDDEN, N_CLASSES)),
        b2=w(ks[12], (1, N_CLASSES)),
    )


def pack_params(raw):
    """One-time repack of raw weights into kernel-ready form (done once at init)."""
    def scale_g(m):
        # Scale g-gate block (PyTorch gate order i,f,g,o) by 2 so the kernel can
        # compute tanh(x) = 2*sigmoid(2x) - 1 from the sigmoid result (exact).
        return m.at[..., 2 * H:3 * H].multiply(2.0)

    wih_f, wih_b = scale_g(raw["wih_f"]), scale_g(raw["wih_b"])
    whh_f, whh_b = scale_g(raw["whh_f"]), scale_g(raw["whh_b"])
    b_f, b_b = scale_g(raw["b_f"]), scale_g(raw["b_b"])

    # Fused input projection [32, 256] (fwd gates | bwd gates).
    wih_cat = jnp.concatenate([wih_f, wih_b], axis=1)
    bih_cat = jnp.concatenate([b_f, b_b], axis=1)

    # Block-diagonal recurrent matrix [64, 256]: one dot per step for both directions.
    whh_blk = (jnp.zeros((2 * H, 2 * G), jnp.float32)
               .at[:H, :G].set(whh_f)
               .at[H:, G:].set(whh_b))

    # Lane-dense final projection: zero-pad 5 logits to 128 columns.
    w2p = jnp.zeros((DNN_HIDDEN, OUT_PAD), jnp.float32).at[:, :N_CLASSES].set(raw["w2"])
    b2p = jnp.zeros((1, OUT_PAD), jnp.float32).at[:, :N_CLASSES].set(raw["b2"])

    bf = jnp.bfloat16
    return dict(
        emb=raw["emb_table"].astype(bf),
        enc_w=raw["enc_w"].astype(bf),
        enc_b=raw["enc_b"],
        wih=wih_cat.astype(bf),
        bih=bih_cat,
        whh=whh_blk.astype(bf),
        w1=raw["w1"].astype(bf),
        b1=raw["b1"],
        w2p=w2p.astype(bf),
        b2p=b2p,
    )


if __name__ == "__main__":
    key = jax.random.PRNGKey(0)
    pkey, xkey = jax.random.split(key)
    params = pack_params(init_raw_params(pkey))

    B, S = 2, 8
    x_ids = jax.random.randint(xkey, (B, S), 0, VOCAB, dtype=jnp.int32)

    logits = encoder_bilstm_dnn_forward(x_ids, params)
    logits = jax.block_until_ready(logits)
    assert logits.shape == (B, N_CLASSES)
    assert bool(jnp.all(jnp.isfinite(logits)))
    print("KERNEL_OK")
</pallas_src>

<mosaic_0001>
module attributes {stable_mosaic.version = 11 : i64} {
  func.func @_encoder_bilstm_dnn_kernel(%arg0: memref<64x1xi32, #tpu.memory_space<vmem>>, %arg1: memref<64x32xbf16, #tpu.memory_space<vmem>>, %arg2: memref<32x32xbf16, #tpu.memory_space<vmem>>, %arg3: memref<1x32xf32, #tpu.memory_space<vmem>>, %arg4: memref<32x256xbf16, #tpu.memory_space<vmem>>, %arg5: memref<1x256xf32, #tpu.memory_space<vmem>>, %arg6: memref<64x256xbf16, #tpu.memory_space<vmem>>, %arg7: memref<64x64xbf16, #tpu.memory_space<vmem>>, %arg8: memref<1x64xf32, #tpu.memory_space<vmem>>, %arg9: memref<64x128xbf16, #tpu.memory_space<vmem>>, %arg10: memref<1x128xf32, #tpu.memory_space<vmem>>, %arg11: memref<8x128xf32, #tpu.memory_space<vmem>>) attributes {dimension_semantics = [], scalar_prefetch = 0 : i64, scratch_operands = 0 : i64, tpu.core_type = #tpu.core_type<tc>} {
    %c0 = arith.constant 0 : index
    %c0_0 = arith.constant 0 : index
    %0 = vector.load %arg0[%c0, %c0_0] : memref<64x1xi32, #tpu.memory_space<vmem>>, vector<64x1xi32>
    %1 = tpu.iota {dimensions = array<i32: 1>} : vector<64x64xi32>
    %2 = vector.broadcast %0 : vector<64x1xi32> to vector<64x64xi32>
    %3 = arith.cmpi eq, %2, %1 : vector<64x64xi32>
    %4 = arith.extui %3 : vector<64x64xi1> to vector<64x64xi32>
    %5 = arith.sitofp %4 : vector<64x64xi32> to vector<64x64xf32>
    %6 = arith.truncf %5 : vector<64x64xf32> to vector<64x64xbf16>
    %c0_1 = arith.constant 0 : index
    %c0_2 = arith.constant 0 : index
    %7 = vector.load %arg1[%c0_1, %c0_2] : memref<64x32xbf16, #tpu.memory_space<vmem>>, vector<64x32xbf16>
    %cst = arith.constant dense<0.000000e+00> : vector<64x32xf32>
    %8 = tpu.matmul %6, %7, %cst {dimension_numbers = #tpu.dot_dimension_numbers<[1], [0], [0], [1], [0, 0, 1, 1], [], []>} : vector<64x64xbf16>, vector<64x32xbf16>, vector<64x32xf32> -> vector<64x32xf32>
    %9 = arith.truncf %8 : vector<64x32xf32> to vector<64x32xbf16>
    %c0_3 = arith.constant 0 : index
    %c0_4 = arith.constant 0 : index
    %10 = vector.load %arg2[%c0_3, %c0_4] : memref<32x32xbf16, #tpu.memory_space<vmem>>, vector<32x32xbf16>
    %cst_5 = arith.constant dense<0.000000e+00> : vector<64x32xf32>
    %11 = tpu.matmul %9, %10, %cst_5 {dimension_numbers = #tpu.dot_dimension_numbers<[1], [0], [0], [1], [0, 0, 1, 1], [], []>} : vector<64x32xbf16>, vector<32x32xbf16>, vector<64x32xf32> -> vector<64x32xf32>
    %c0_6 = arith.constant 0 : index
    %c0_7 = arith.constant 0 : index
    %12 = vector.load %arg3[%c0_6, %c0_7] : memref<1x32xf32, #tpu.memory_space<vmem>>, vector<1x32xf32>
    %13 = vector.broadcast %12 : vector<1x32xf32> to vector<64x32xf32>
    %14 = arith.addf %11, %13 : vector<64x32xf32>
    %15 = math.tanh %14 : vector<64x32xf32>
    %16 = arith.truncf %15 : vector<64x32xf32> to vector<64x32xbf16>
    %c0_8 = arith.constant 0 : index
    %c0_9 = arith.constant 0 : index
    %17 = vector.load %arg4[%c0_8, %c0_9] : memref<32x256xbf16, #tpu.memory_space<vmem>>, vector<32x256xbf16>
    %cst_10 = arith.constant dense<0.000000e+00> : vector<64x256xf32>
    %18 = tpu.matmul %16, %17, %cst_10 {dimension_numbers = #tpu.dot_dimension_numbers<[1], [0], [0], [1], [0, 0, 1, 1], [], []>} : vector<64x32xbf16>, vector<32x256xbf16>, vector<64x256xf32> -> vector<64x256xf32>
    %c0_11 = arith.constant 0 : index
    %c0_12 = arith.constant 0 : index
    %19 = vector.load %arg5[%c0_11, %c0_12] : memref<1x256xf32, #tpu.memory_space<vmem>>, vector<1x256xf32>
    %20 = vector.broadcast %19 : vector<1x256xf32> to vector<64x256xf32>
    %21 = arith.addf %18, %20 : vector<64x256xf32>
    %c0_13 = arith.constant 0 : index
    %c0_14 = arith.constant 0 : index
    %22 = vector.load %arg6[%c0_13, %c0_14] : memref<64x256xbf16, #tpu.memory_space<vmem>>, vector<64x256xbf16>
    %23 = vector.extract_strided_slice %21 {offsets = [0, 0], sizes = [8, 128], strides = [1, 1]} : vector<64x256xf32> to vector<8x128xf32>
    %24 = vector.extract_strided_slice %21 {offsets = [56, 128], sizes = [8, 128], strides = [1, 1]} : vector<64x256xf32> to vector<8x128xf32>
    %25 = arith.negf %23 : vector<8x128xf32>
    %26 = math.exp %25 : vector<8x128xf32>
    %cst_15 = arith.constant 1.000000e+00 : f32
    %27 = vector.broadcast %cst_15 : f32 to vector<8x128xf32>
    %28 = arith.addf %27, %26 : vector<8x128xf32>
    %29 = arith.divf %27, %28 : vector<8x128xf32>
    %30 = arith.negf %24 : vector<8x128xf32>
    %31 = math.exp %30 : vector<8x128xf32>
    %cst_16 = arith.constant 1.000000e+00 : f32
    %32 = vector.broadcast %cst_16 : f32 to vector<8x128xf32>
    %33 = arith.addf %32, %31 : vector<8x128xf32>
    %34 = arith.divf %32, %33 : vector<8x128xf32>
    %cst_17 = arith.constant 0.000000e+00 : f32
    %35 = vector.broadcast %cst_17 : f32 to vector<8x32xf32>
    %36 = vector.extract_strided_slice %29 {offsets = [0, 32], sizes = [8, 32], strides = [1, 1]} : vector<8x128xf32> to vector<8x32xf32>
    %37 = arith.mulf %36, %35 : vector<8x32xf32>
    %38 = vector.extract_strided_slice %29 {offsets = [0, 0], sizes = [8, 32], strides = [1, 1]} : vector<8x128xf32> to vector<8x32xf32>
    %39 = vector.extract_strided_slice %29 {offsets = [0, 64], sizes = [8, 32], strides = [1, 1]} : vector<8x128xf32> to vector<8x32xf32>
    %cst_18 = arith.constant 2.000000e+00 : f32
    %40 = vector.broadcast %cst_18 : f32 to vector<8x32xf32>
    %41 = arith.mulf %40, %39 : vector<8x32xf32>
    %cst_19 = arith.constant 1.000000e+00 : f32
    %42 = vector.broadcast %cst_19 : f32 to vector<8x32xf32>
    %43 = arith.subf %41, %42 : vector<8x32xf32>
    %44 = arith.mulf %38, %43 : vector<8x32xf32>
    %45 = arith.addf %37, %44 : vector<8x32xf32>
    %46 = vector.extract_strided_slice %29 {offsets = [0, 96], sizes = [8, 32], strides = [1, 1]} : vector<8x128xf32> to vector<8x32xf32>
    %47 = math.tanh %45 : vector<8x32xf32>
    %48 = arith.mulf %46, %47 : vector<8x32xf32>
    %49 = vector.extract_strided_slice %34 {offsets = [0, 32], sizes = [8, 32], strides = [1, 1]} : vector<8x128xf32> to vector<8x32xf32>
    %50 = arith.mulf %49, %35 : vector<8x32xf32>
    %51 = vector.extract_strided_slice %34 {offsets = [0, 0], sizes = [8, 32], strides = [1, 1]} : vector<8x128xf32> to vector<8x32xf32>
    %52 = vector.extract_strided_slice %34 {offsets = [0, 64], sizes = [8, 32], strides = [1, 1]} : vector<8x128xf32> to vector<8x32xf32>
    %cst_20 = arith.constant 2.000000e+00 : f32
    %53 = vector.broadcast %cst_20 : f32 to vector<8x32xf32>
    %54 = arith.mulf %53, %52 : vector<8x32xf32>
    %cst_21 = arith.constant 1.000000e+00 : f32
    %55 = vector.broadcast %cst_21 : f32 to vector<8x32xf32>
    %56 = arith.subf %54, %55 : vector<8x32xf32>
    %57 = arith.mulf %51, %56 : vector<8x32xf32>
    %58 = arith.addf %50, %57 : vector<8x32xf32>
    %59 = vector.extract_strided_slice %34 {offsets = [0, 96], sizes = [8, 32], strides = [1, 1]} : vector<8x128xf32> to vector<8x32xf32>
    %60 = math.tanh %58 : vector<8x32xf32>
    %61 = arith.mulf %59, %60 : vector<8x32xf32>
    %62 = tpu.concatenate %48, %61 in 1 : vector<8x32xf32>, vector<8x32xf32> -> vector<8x64xf32>
    %63 = arith.truncf %62 : vector<8x64xf32> to vector<8x64xbf16>
    %cst_22 = arith.constant dense<0.000000e+00> : vector<8x256xf32>
    %64 = tpu.matmul %63, %22, %cst_22 {dimension_numbers = #tpu.dot_dimension_numbers<[1], [0], [0], [1], [0, 0, 1, 1], [], []>} : vector<8x64xbf16>, vector<64x256xbf16>, vector<8x256xf32> -> vector<8x256xf32>
    %65 = vector.extract_strided_slice %21 {offsets = [8, 0], sizes = [8, 128], strides = [1, 1]} : vector<64x256xf32> to vector<8x128xf32>
    %66 = vector.extract_strided_slice %21 {offsets = [48, 128], sizes = [8, 128], strides = [1, 1]} : vector<64x256xf32> to vector<8x128xf32>
    %67 = vector.extract_strided_slice %64 {offsets = [0, 0], sizes = [8, 128], strides = [1, 1]} : vector<8x256xf32> to vector<8x128xf32>
    %68 = arith.addf %67, %65 : vector<8x128xf32>
    %69 = arith.negf %68 : vector<8x128xf32>
    %70 = math.exp %69 : vector<8x128xf32>
    %cst_23 = arith.constant 1.000000e+00 : f32
    %71 = vector.broadcast %cst_23 : f32 to vector<8x128xf32>
    %72 = arith.addf %71, %70 : vector<8x128xf32>
    %73 = arith.divf %71, %72 : vector<8x128xf32>
    %74 = vector.extract_strided_slice %64 {offsets = [0, 128], sizes = [8, 128], strides = [1, 1]} : vector<8x256xf32> to vector<8x128xf32>
    %75 = arith.addf %74, %66 : vector<8x128xf32>
    %76 = arith.negf %75 : vector<8x128xf32>
    %77 = math.exp %76 : vector<8x128xf32>
    %cst_24 = arith.constant 1.000000e+00 : f32
    %78 = vector.broadcast %cst_24 : f32 to vector<8x128xf32>
    %79 = arith.addf %78, %77 : vector<8x128xf32>
    %80 = arith.divf %78, %79 : vector<8x128xf32>
    %81 = vector.extract_strided_slice %73 {offsets = [0, 32], sizes = [8, 32], strides = [1, 1]} : vector<8x128xf32> to vector<8x32xf32>
    %82 = arith.mulf %81, %45 : vector<8x32xf32>
    %83 = vector.extract_strided_slice %73 {offsets = [0, 0], sizes = [8, 32], strides = [1, 1]} : vector<8x128xf32> to vector<8x32xf32>
    %84 = vector.extract_strided_slice %73 {offsets = [0, 64], sizes = [8, 32], strides = [1, 1]} : vector<8x128xf32> to vector<8x32xf32>
    %cst_25 = arith.constant 2.000000e+00 : f32
    %85 = vector.broadcast %cst_25 : f32 to vector<8x32xf32>
    %86 = arith.mulf %85, %84 : vector<8x32xf32>
    %cst_26 = arith.constant 1.000000e+00 : f32
    %87 = vector.broadcast %cst_26 : f32 to vector<8x32xf32>
    %88 = arith.subf %86, %87 : vector<8x32xf32>
    %89 = arith.mulf %83, %88 : vector<8x32xf32>
    %90 = arith.addf %82, %89 : vector<8x32xf32>
    %91 = vector.extract_strided_slice %73 {offsets = [0, 96], sizes = [8, 32], strides = [1, 1]} : vector<8x128xf32> to vector<8x32xf32>
    %92 = math.tanh %90 : vector<8x32xf32>
    %93 = arith.mulf %91, %92 : vector<8x32xf32>
    %94 = vector.extract_strided_slice %80 {offsets = [0, 32], sizes = [8, 32], strides = [1, 1]} : vector<8x128xf32> to vector<8x32xf32>
    %95 = arith.mulf %94, %58 : vector<8x32xf32>
    %96 = vector.extract_strided_slice %80 {offsets = [0, 0], sizes = [8, 32], strides = [1, 1]} : vector<8x128xf32> to vector<8x32xf32>
    %97 = vector.extract_strided_slice %80 {offsets = [0, 64], sizes = [8, 32], strides = [1, 1]} : vector<8x128xf32> to vector<8x32xf32>
    %cst_27 = arith.constant 2.000000e+00 : f32
    %98 = vector.broadcast %cst_27 : f32 to vector<8x32xf32>
    %99 = arith.mulf %98, %97 : vector<8x32xf32>
    %cst_28 = arith.constant 1.000000e+00 : f32
    %100 = vector.broadcast %cst_28 : f32 to vector<8x32xf32>
    %101 = arith.subf %99, %100 : vector<8x32xf32>
    %102 = arith.mulf %96, %101 : vector<8x32xf32>
    %103 = arith.addf %95, %102 : vector<8x32xf32>
    %104 = vector.extract_strided_slice %80 {offsets = [0, 96], sizes = [8, 32], strides = [1, 1]} : vector<8x128xf32> to vector<8x32xf32>
    %105 = math.tanh %103 : vector<8x32xf32>
    %106 = arith.mulf %104, %105 : vector<8x32xf32>
    %107 = tpu.concatenate %93, %106 in 1 : vector<8x32xf32>, vector<8x32xf32> -> vector<8x64xf32>
    %108 = arith.truncf %107 : vector<8x64xf32> to vector<8x64xbf16>
    %cst_29 = arith.constant dense<0.000000e+00> : vector<8x256xf32>
    %109 = tpu.matmul %108, %22, %cst_29 {dimension_numbers = #tpu.dot_dimension_numbers<[1], [0], [0], [1], [0, 0, 1, 1], [], []>} : vector<8x64xbf16>, vector<64x256xbf16>, vector<8x256xf32> -> vector<8x256xf32>
    %110 = vector.extract_strided_slice %21 {offsets = [16, 0], sizes = [8, 128], strides = [1, 1]} : vector<64x256xf32> to vector<8x128xf32>
    %111 = vector.extract_strided_slice %21 {offsets = [40, 128], sizes = [8, 128], strides = [1, 1]} : vector<64x256xf32> to vector<8x128xf32>
    %112 = vector.extract_strided_slice %109 {offsets = [0, 0], sizes = [8, 128], strides = [1, 1]} : vector<8x256xf32> to vector<8x128xf32>
    %113 = arith.addf %112, %110 : vector<8x128xf32>
    %114 = arith.negf %113 : vector<8x128xf32>
    %115 = math.exp %114 : vector<8x128xf32>
    %cst_30 = arith.constant 1.000000e+00 : f32
    %116 = vector.broadcast %cst_30 : f32 to vector<8x128xf32>
    %117 = arith.addf %116, %115 : vector<8x128xf32>
    %118 = arith.divf %116, %117 : vector<8x128xf32>
    %119 = vector.extract_strided_slice %109 {offsets = [0, 128], sizes = [8, 128], strides = [1, 1]} : vector<8x256xf32> to vector<8x128xf32>
    %120 = arith.addf %119, %111 : vector<8x128xf32>
    %121 = arith.negf %120 : vector<8x128xf32>
    %122 = math.exp %121 : vector<8x128xf32>
    %cst_31 = arith.constant 1.000000e+00 : f32
    %123 = vector.broadcast %cst_31 : f32 to vector<8x128xf32>
    %124 = arith.addf %123, %122 : vector<8x128xf32>
    %125 = arith.divf %123, %124 : vector<8x128xf32>
    %126 = vector.extract_strided_slice %118 {offsets = [0, 32], sizes = [8, 32], strides = [1, 1]} : vector<8x128xf32> to vector<8x32xf32>
    %127 = arith.mulf %126, %90 : vector<8x32xf32>
    %128 = vector.extract_strided_slice %118 {offsets = [0, 0], sizes = [8, 32], strides = [1, 1]} : vector<8x128xf32> to vector<8x32xf32>
    %129 = vector.extract_strided_slice %118 {offsets = [0, 64], sizes = [8, 32], strides = [1, 1]} : vector<8x128xf32> to vector<8x32xf32>
    %cst_32 = arith.constant 2.000000e+00 : f32
    %130 = vector.broadcast %cst_32 : f32 to vector<8x32xf32>
    %131 = arith.mulf %130, %129 : vector<8x32xf32>
    %cst_33 = arith.constant 1.000000e+00 : f32
    %132 = vector.broadcast %cst_33 : f32 to vector<8x32xf32>
    %133 = arith.subf %131, %132 : vector<8x32xf32>
    %134 = arith.mulf %128, %133 : vector<8x32xf32>
    %135 = arith.addf %127, %134 : vector<8x32xf32>
    %136 = vector.extract_strided_slice %118 {offsets = [0, 96], sizes = [8, 32], strides = [1, 1]} : vector<8x128xf32> to vector<8x32xf32>
    %137 = math.tanh %135 : vector<8x32xf32>
    %138 = arith.mulf %136, %137 : vector<8x32xf32>
    %139 = vector.extract_strided_slice %125 {offsets = [0, 32], sizes = [8, 32], strides = [1, 1]} : vector<8x128xf32> to vector<8x32xf32>
    %140 = arith.mulf %139, %103 : vector<8x32xf32>
    %141 = vector.extract_strided_slice %125 {offsets = [0, 0], sizes = [8, 32], strides = [1, 1]} : vector<8x128xf32> to vector<8x32xf32>
    %142 = vector.extract_strided_slice %125 {offsets = [0, 64], sizes = [8, 32], strides = [1, 1]} : vector<8x128xf32> to vector<8x32xf32>
    %cst_34 = arith.constant 2.000000e+00 : f32
    %143 = vector.broadcast %cst_34 : f32 to vector<8x32xf32>
    %144 = arith.mulf %143, %142 : vector<8x32xf32>
    %cst_35 = arith.constant 1.000000e+00 : f32
    %145 = vector.broadcast %cst_35 : f32 to vector<8x32xf32>
    %146 = arith.subf %144, %145 : vector<8x32xf32>
    %147 = arith.mulf %141, %146 : vector<8x32xf32>
    %148 = arith.addf %140, %147 : vector<8x32xf32>
    %149 = vector.extract_strided_slice %125 {offsets = [0, 96], sizes = [8, 32], strides = [1, 1]} : vector<8x128xf32> to vector<8x32xf32>
    %150 = math.tanh %148 : vector<8x32xf32>
    %151 = arith.mulf %149, %150 : vector<8x32xf32>
    %152 = tpu.concatenate %138, %151 in 1 : vector<8x32xf32>, vector<8x32xf32> -> vector<8x64xf32>
    %153 = arith.truncf %152 : vector<8x64xf32> to vector<8x64xbf16>
    %cst_36 = arith.constant dense<0.000000e+00> : vector<8x256xf32>
    %154 = tpu.matmul %153, %22, %cst_36 {dimension_numbers = #tpu.dot_dimension_numbers<[1], [0], [0], [1], [0, 0, 1, 1], [], []>} : vector<8x64xbf16>, vector<64x256xbf16>, vector<8x256xf32> -> vector<8x256xf32>
    %155 = vector.extract_strided_slice %21 {offsets = [24, 0], sizes = [8, 128], strides = [1, 1]} : vector<64x256xf32> to vector<8x128xf32>
    %156 = vector.extract_strided_slice %21 {offsets = [32, 128], sizes = [8, 128], strides = [1, 1]} : vector<64x256xf32> to vector<8x128xf32>
    %157 = vector.extract_strided_slice %154 {offsets = [0, 0], sizes = [8, 128], strides = [1, 1]} : vector<8x256xf32> to vector<8x128xf32>
    %158 = arith.addf %157, %155 : vector<8x128xf32>
    %159 = arith.negf %158 : vector<8x128xf32>
    %160 = math.exp %159 : vector<8x128xf32>
    %cst_37 = arith.constant 1.000000e+00 : f32
    %161 = vector.broadcast %cst_37 : f32 to vector<8x128xf32>
    %162 = arith.addf %161, %160 : vector<8x128xf32>
    %163 = arith.divf %161, %162 : vector<8x128xf32>
    %164 = vector.extract_strided_slice %154 {offsets = [0, 128], sizes = [8, 128], strides = [1, 1]} : vector<8x256xf32> to vector<8x128xf32>
    %165 = arith.addf %164, %156 : vector<8x128xf32>
    %166 = arith.negf %165 : vector<8x128xf32>
    %167 = math.exp %166 : vector<8x128xf32>
    %cst_38 = arith.constant 1.000000e+00 : f32
    %168 = vector.broadcast %cst_38 : f32 to vector<8x128xf32>
    %169 = arith.addf %168, %167 : vector<8x128xf32>
    %170 = arith.divf %168, %169 : vector<8x128xf32>
    %171 = vector.extract_strided_slice %163 {offsets = [0, 32], sizes = [8, 32], strides = [1, 1]} : vector<8x128xf32> to vector<8x32xf32>
    %172 = arith.mulf %171, %135 : vector<8x32xf32>
    %173 = vector.extract_strided_slice %163 {offsets = [0, 0], sizes = [8, 32], strides = [1, 1]} : vector<8x128xf32> to vector<8x32xf32>
    %174 = vector.extract_strided_slice %163 {offsets = [0, 64], sizes = [8, 32], strides = [1, 1]} : vector<8x128xf32> to vector<8x32xf32>
    %cst_39 = arith.constant 2.000000e+00 : f32
    %175 = vector.broadcast %cst_39 : f32 to vector<8x32xf32>
    %176 = arith.mulf %175, %174 : vector<8x32xf32>
    %cst_40 = arith.constant 1.000000e+00 : f32
    %177 = vector.broadcast %cst_40 : f32 to vector<8x32xf32>
    %178 = arith.subf %176, %177 : vector<8x32xf32>
    %179 = arith.mulf %173, %178 : vector<8x32xf32>
    %180 = arith.addf %172, %179 : vector<8x32xf32>
    %181 = vector.extract_strided_slice %163 {offsets = [0, 96], sizes = [8, 32], strides = [1, 1]} : vector<8x128xf32> to vector<8x32xf32>
    %182 = math.tanh %180 : vector<8x32xf32>
    %183 = arith.mulf %181, %182 : vector<8x32xf32>
    %184 = vector.extract_strided_slice %170 {offsets = [0, 32], sizes = [8, 32], strides = [1, 1]} : vector<8x128xf32> to vector<8x32xf32>
    %185 = arith.mulf %184, %148 : vector<8x32xf32>
    %186 = vector.extract_strided_slice %170 {offsets = [0, 0], sizes = [8, 32], strides = [1, 1]} : vector<8x128xf32> to vector<8x32xf32>
    %187 = vector.extract_strided_slice %170 {offsets = [0, 64], sizes = [8, 32], strides = [1, 1]} : vector<8x128xf32> to vector<8x32xf32>
    %cst_41 = arith.constant 2.000000e+00 : f32
    %188 = vector.broadcast %cst_41 : f32 to vector<8x32xf32>
    %189 = arith.mulf %188, %187 : vector<8x32xf32>
    %cst_42 = arith.constant 1.000000e+00 : f32
    %190 = vector.broadcast %cst_42 : f32 to vector<8x32xf32>
    %191 = arith.subf %189, %190 : vector<8x32xf32>
    %192 = arith.mulf %186, %191 : vector<8x32xf32>
    %193 = arith.addf %185, %192 : vector<8x32xf32>
    %194 = vector.extract_strided_slice %170 {offsets = [0, 96], sizes = [8, 32], strides = [1, 1]} : vector<8x128xf32> to vector<8x32xf32>
    %195 = math.tanh %193 : vector<8x32xf32>
    %196 = arith.mulf %194, %195 : vector<8x32xf32>
    %197 = tpu.concatenate %183, %196 in 1 : vector<8x32xf32>, vector<8x32xf32> -> vector<8x64xf32>
    %198 = arith.truncf %197 : vector<8x64xf32> to vector<8x64xbf16>
    %cst_43 = arith.constant dense<0.000000e+00> : vector<8x256xf32>
    %199 = tpu.matmul %198, %22, %cst_43 {dimension_numbers = #tpu.dot_dimension_numbers<[1], [0], [0], [1], [0, 0, 1, 1], [], []>} : vector<8x64xbf16>, vector<64x256xbf16>, vector<8x256xf32> -> vector<8x256xf32>
    %200 = vector.extract_strided_slice %21 {offsets = [32, 0], sizes = [8, 128], strides = [1, 1]} : vector<64x256xf32> to vector<8x128xf32>
    %201 = vector.extract_strided_slice %21 {offsets = [24, 128], sizes = [8, 128], strides = [1, 1]} : vector<64x256xf32> to vector<8x128xf32>
    %202 = vector.extract_strided_slice %199 {offsets = [0, 0], sizes = [8, 128], strides = [1, 1]} : vector<8x256xf32> to vector<8x128xf32>
    %203 = arith.addf %202, %200 : vector<8x128xf32>
    %204 = arith.negf %203 : vector<8x128xf32>
    %205 = math.exp %204 : vector<8x128xf32>
    %cst_44 = arith.constant 1.000000e+00 : f32
    %206 = vector.broadcast %cst_44 : f32 to vector<8x128xf32>
    %207 = arith.addf %206, %205 : vector<8x128xf32>
    %208 = arith.divf %206, %207 : vector<8x128xf32>
    %209 = vector.extract_strided_slice %199 {offsets = [0, 128], sizes = [8, 128], strides = [1, 1]} : vector<8x256xf32> to vector<8x128xf32>
    %210 = arith.addf %209, %201 : vector<8x128xf32>
    %211 = arith.negf %210 : vector<8x128xf32>
    %212 = math.exp %211 : vector<8x128xf32>
    %cst_45 = arith.constant 1.000000e+00 : f32
    %213 = vector.broadcast %cst_45 : f32 to vector<8x128xf32>
    %214 = arith.addf %213, %212 : vector<8x128xf32>
    %215 = arith.divf %213, %214 : vector<8x128xf32>
    %216 = vector.extract_strided_slice %208 {offsets = [0, 32], sizes = [8, 32], strides = [1, 1]} : vector<8x128xf32> to vector<8x32xf32>
    %217 = arith.mulf %216, %180 : vector<8x32xf32>
    %218 = vector.extract_strided_slice %208 {offsets = [0, 0], sizes = [8, 32], strides = [1, 1]} : vector<8x128xf32> to vector<8x32xf32>
    %219 = vector.extract_strided_slice %208 {offsets = [0, 64], sizes = [8, 32], strides = [1, 1]} : vector<8x128xf32> to vector<8x32xf32>
    %cst_46 = arith.constant 2.000000e+00 : f32
    %220 = vector.broadcast %cst_46 : f32 to vector<8x32xf32>
    %221 = arith.mulf %220, %219 : vector<8x32xf32>
    %cst_47 = arith.constant 1.000000e+00 : f32
    %222 = vector.broadcast %cst_47 : f32 to vector<8x32xf32>
    %223 = arith.subf %221, %222 : vector<8x32xf32>
    %224 = arith.mulf %218, %223 : vector<8x32xf32>
    %225 = arith.addf %217, %224 : vector<8x32xf32>
    %226 = vector.extract_strided_slice %208 {offsets = [0, 96], sizes = [8, 32], strides = [1, 1]} : vector<8x128xf32> to vector<8x32xf32>
    %227 = math.tanh %225 : vector<8x32xf32>
    %228 = arith.mulf %226, %227 : vector<8x32xf32>
    %229 = vector.extract_strided_slice %215 {offsets = [0, 32], sizes = [8, 32], strides = [1, 1]} : vector<8x128xf32> to vector<8x32xf32>
    %230 = arith.mulf %229, %193 : vector<8x32xf32>
    %231 = vector.extract_strided_slice %215 {offsets = [0, 0], sizes = [8, 32], strides = [1, 1]} : vector<8x128xf32> to vector<8x32xf32>
    %232 = vector.extract_strided_slice %215 {offsets = [0, 64], sizes = [8, 32], strides = [1, 1]} : vector<8x128xf32> to vector<8x32xf32>
    %cst_48 = arith.constant 2.000000e+00 : f32
    %233 = vector.broadcast %cst_48 : f32 to vector<8x32xf32>
    %234 = arith.mulf %233, %232 : vector<8x32xf32>
    %cst_49 = arith.constant 1.000000e+00 : f32
    %235 = vector.broadcast %cst_49 : f32 to vector<8x32xf32>
    %236 = arith.subf %234, %235 : vector<8x32xf32>
    %237 = arith.mulf %231, %236 : vector<8x32xf32>
    %238 = arith.addf %230, %237 : vector<8x32xf32>
    %239 = vector.extract_strided_slice %215 {offsets = [0, 96], sizes = [8, 32], strides = [1, 1]} : vector<8x128xf32> to vector<8x32xf32>
    %240 = math.tanh %238 : vector<8x32xf32>
    %241 = arith.mulf %239, %240 : vector<8x32xf32>
    %242 = tpu.concatenate %228, %241 in 1 : vector<8x32xf32>, vector<8x32xf32> -> vector<8x64xf32>
    %243 = arith.truncf %242 : vector<8x64xf32> to vector<8x64xbf16>
    %cst_50 = arith.constant dense<0.000000e+00> : vector<8x256xf32>
    %244 = tpu.matmul %243, %22, %cst_50 {dimension_numbers = #tpu.dot_dimension_numbers<[1], [0], [0], [1], [0, 0, 1, 1], [], []>} : vector<8x64xbf16>, vector<64x256xbf16>, vector<8x256xf32> -> vector<8x256xf32>
    %245 = vector.extract_strided_slice %21 {offsets = [40, 0], sizes = [8, 128], strides = [1, 1]} : vector<64x256xf32> to vector<8x128xf32>
    %246 = vector.extract_strided_slice %21 {offsets = [16, 128], sizes = [8, 128], strides = [1, 1]} : vector<64x256xf32> to vector<8x128xf32>
    %247 = vector.extract_strided_slice %244 {offsets = [0, 0], sizes = [8, 128], strides = [1, 1]} : vector<8x256xf32> to vector<8x128xf32>
    %248 = arith.addf %247, %245 : vector<8x128xf32>
    %249 = arith.negf %248 : vector<8x128xf32>
    %250 = math.exp %249 : vector<8x128xf32>
    %cst_51 = arith.constant 1.000000e+00 : f32
    %251 = vector.broadcast %cst_51 : f32 to vector<8x128xf32>
    %252 = arith.addf %251, %250 : vector<8x128xf32>
    %253 = arith.divf %251, %252 : vector<8x128xf32>
    %254 = vector.extract_strided_slice %244 {offsets = [0, 128], sizes = [8, 128], strides = [1, 1]} : vector<8x256xf32> to vector<8x128xf32>
    %255 = arith.addf %254, %246 : vector<8x128xf32>
    %256 = arith.negf %255 : vector<8x128xf32>
    %257 = math.exp %256 : vector<8x128xf32>
    %cst_52 = arith.constant 1.000000e+00 : f32
    %258 = vector.broadcast %cst_52 : f32 to vector<8x128xf32>
    %259 = arith.addf %258, %257 : vector<8x128xf32>
    %260 = arith.divf %258, %259 : vector<8x128xf32>
    %261 = vector.extract_strided_slice %253 {offsets = [0, 32], sizes = [8, 32], strides = [1, 1]} : vector<8x128xf32> to vector<8x32xf32>
    %262 = arith.mulf %261, %225 : vector<8x32xf32>
    %263 = vector.extract_strided_slice %253 {offsets = [0, 0], sizes = [8, 32], strides = [1, 1]} : vector<8x128xf32> to vector<8x32xf32>
    %264 = vector.extract_strided_slice %253 {offsets = [0, 64], sizes = [8, 32], strides = [1, 1]} : vector<8x128xf32> to vector<8x32xf32>
    %cst_53 = arith.constant 2.000000e+00 : f32
    %265 = vector.broadcast %cst_53 : f32 to vector<8x32xf32>
    %266 = arith.mulf %265, %264 : vector<8x32xf32>
    %cst_54 = arith.constant 1.000000e+00 : f32
    %267 = vector.broadcast %cst_54 : f32 to vector<8x32xf32>
    %268 = arith.subf %266, %267 : vector<8x32xf32>
    %269 = arith.mulf %263, %268 : vector<8x32xf32>
    %270 = arith.addf %262, %269 : vector<8x32xf32>
    %271 = vector.extract_strided_slice %253 {offsets = [0, 96], sizes = [8, 32], strides = [1, 1]} : vector<8x128xf32> to vector<8x32xf32>
    %272 = math.tanh %270 : vector<8x32xf32>
    %273 = arith.mulf %271, %272 : vector<8x32xf32>
    %274 = vector.extract_strided_slice %260 {offsets = [0, 32], sizes = [8, 32], strides = [1, 1]} : vector<8x128xf32> to vector<8x32xf32>
    %275 = arith.mulf %274, %238 : vector<8x32xf32>
    %276 = vector.extract_strided_slice %260 {offsets = [0, 0], sizes = [8, 32], strides = [1, 1]} : vector<8x128xf32> to vector<8x32xf32>
    %277 = vector.extract_strided_slice %260 {offsets = [0, 64], sizes = [8, 32], strides = [1, 1]} : vector<8x128xf32> to vector<8x32xf32>
    %cst_55 = arith.constant 2.000000e+00 : f32
    %278 = vector.broadcast %cst_55 : f32 to vector<8x32xf32>
    %279 = arith.mulf %278, %277 : vector<8x32xf32>
    %cst_56 = arith.constant 1.000000e+00 : f32
    %280 = vector.broadcast %cst_56 : f32 to vector<8x32xf32>
    %281 = arith.subf %279, %280 : vector<8x32xf32>
    %282 = arith.mulf %276, %281 : vector<8x32xf32>
    %283 = arith.addf %275, %282 : vector<8x32xf32>
    %284 = vector.extract_strided_slice %260 {offsets = [0, 96], sizes = [8, 32], strides = [1, 1]} : vector<8x128xf32> to vector<8x32xf32>
    %285 = math.tanh %283 : vector<8x32xf32>
    %286 = arith.mulf %284, %285 : vector<8x32xf32>
    %287 = tpu.concatenate %273, %286 in 1 : vector<8x32xf32>, vector<8x32xf32> -> vector<8x64xf32>
    %288 = arith.truncf %287 : vector<8x64xf32> to vector<8x64xbf16>
    %cst_57 = arith.constant dense<0.000000e+00> : vector<8x256xf32>
    %289 = tpu.matmul %288, %22, %cst_57 {dimension_numbers = #tpu.dot_dimension_numbers<[1], [0], [0], [1], [0, 0, 1, 1], [], []>} : vector<8x64xbf16>, vector<64x256xbf16>, vector<8x256xf32> -> vector<8x256xf32>
    %290 = vector.extract_strided_slice %21 {offsets = [48, 0], sizes = [8, 128], strides = [1, 1]} : vector<64x256xf32> to vector<8x128xf32>
    %291 = vector.extract_strided_slice %21 {offsets = [8, 128], sizes = [8, 128], strides = [1, 1]} : vector<64x256xf32> to vector<8x128xf32>
    %292 = vector.extract_strided_slice %289 {offsets = [0, 0], sizes = [8, 128], strides = [1, 1]} : vector<8x256xf32> to vector<8x128xf32>
    %293 = arith.addf %292, %290 : vector<8x128xf32>
    %294 = arith.negf %293 : vector<8x128xf32>
    %295 = math.exp %294 : vector<8x128xf32>
    %cst_58 = arith.constant 1.000000e+00 : f32
    %296 = vector.broadcast %cst_58 : f32 to vector<8x128xf32>
    %297 = arith.addf %296, %295 : vector<8x128xf32>
    %298 = arith.divf %296, %297 : vector<8x128xf32>
    %299 = vector.extract_strided_slice %289 {offsets = [0, 128], sizes = [8, 128], strides = [1, 1]} : vector<8x256xf32> to vector<8x128xf32>
    %300 = arith.addf %299, %291 : vector<8x128xf32>
    %301 = arith.negf %300 : vector<8x128xf32>
    %302 = math.exp %301 : vector<8x128xf32>
    %cst_59 = arith.constant 1.000000e+00 : f32
    %303 = vector.broadcast %cst_59 : f32 to vector<8x128xf32>
    %304 = arith.addf %303, %302 : vector<8x128xf32>
    %305 = arith.divf %303, %304 : vector<8x128xf32>
    %306 = vector.extract_strided_slice %298 {offsets = [0, 32], sizes = [8, 32], strides = [1, 1]} : vector<8x128xf32> to vector<8x32xf32>
    %307 = arith.mulf %306, %270 : vector<8x32xf32>
    %308 = vector.extract_strided_slice %298 {offsets = [0, 0], sizes = [8, 32], strides = [1, 1]} : vector<8x128xf32> to vector<8x32xf32>
    %309 = vector.extract_strided_slice %298 {offsets = [0, 64], sizes = [8, 32], strides = [1, 1]} : vector<8x128xf32> to vector<8x32xf32>
    %cst_60 = arith.constant 2.000000e+00 : f32
    %310 = vector.broadcast %cst_60 : f32 to vector<8x32xf32>
    %311 = arith.mulf %310, %309 : vector<8x32xf32>
    %cst_61 = arith.constant 1.000000e+00 : f32
    %312 = vector.broadcast %cst_61 : f32 to vector<8x32xf32>
    %313 = arith.subf %311, %312 : vector<8x32xf32>
    %314 = arith.mulf %308, %313 : vector<8x32xf32>
    %315 = arith.addf %307, %314 : vector<8x32xf32>
    %316 = vector.extract_strided_slice %298 {offsets = [0, 96], sizes = [8, 32], strides = [1, 1]} : vector<8x128xf32> to vector<8x32xf32>
    %317 = math.tanh %315 : vector<8x32xf32>
    %318 = arith.mulf %316, %317 : vector<8x32xf32>
    %319 = vector.extract_strided_slice %305 {offsets = [0, 32], sizes = [8, 32], strides = [1, 1]} : vector<8x128xf32> to vector<8x32xf32>
    %320 = arith.mulf %319, %283 : vector<8x32xf32>
    %321 = vector.extract_strided_slice %305 {offsets = [0, 0], sizes = [8, 32], strides = [1, 1]} : vector<8x128xf32> to vector<8x32xf32>
    %322 = vector.extract_strided_slice %305 {offsets = [0, 64], sizes = [8, 32], strides = [1, 1]} : vector<8x128xf32> to vector<8x32xf32>
    %cst_62 = arith.constant 2.000000e+00 : f32
    %323 = vector.broadcast %cst_62 : f32 to vector<8x32xf32>
    %324 = arith.mulf %323, %322 : vector<8x32xf32>
    %cst_63 = arith.constant 1.000000e+00 : f32
    %325 = vector.broadcast %cst_63 : f32 to vector<8x32xf32>
    %326 = arith.subf %324, %325 : vector<8x32xf32>
    %327 = arith.mulf %321, %326 : vector<8x32xf32>
    %328 = arith.addf %320, %327 : vector<8x32xf32>
    %329 = vector.extract_strided_slice %305 {offsets = [0, 96], sizes = [8, 32], strides = [1, 1]} : vector<8x128xf32> to vector<8x32xf32>
    %330 = math.tanh %328 : vector<8x32xf32>
    %331 = arith.mulf %329, %330 : vector<8x32xf32>
    %332 = tpu.concatenate %318, %331 in 1 : vector<8x32xf32>, vector<8x32xf32> -> vector<8x64xf32>
    %333 = arith.truncf %332 : vector<8x64xf32> to vector<8x64xbf16>
    %cst_64 = arith.constant dense<0.000000e+00> : vector<8x256xf32>
    %334 = tpu.matmul %333, %22, %cst_64 {dimension_numbers = #tpu.dot_dimension_numbers<[1], [0], [0], [1], [0, 0, 1, 1], [], []>} : vector<8x64xbf16>, vector<64x256xbf16>, vector<8x256xf32> -> vector<8x256xf32>
    %335 = vector.extract_strided_slice %21 {offsets = [56, 0], sizes = [8, 128], strides = [1, 1]} : vector<64x256xf32> to vector<8x128xf32>
    %336 = vector.extract_strided_slice %21 {offsets = [0, 128], sizes = [8, 128], strides = [1, 1]} : vector<64x256xf32> to vector<8x128xf32>
    %337 = vector.extract_strided_slice %334 {offsets = [0, 0], sizes = [8, 128], strides = [1, 1]} : vector<8x256xf32> to vector<8x128xf32>
    %338 = arith.addf %337, %335 : vector<8x128xf32>
    %339 = arith.negf %338 : vector<8x128xf32>
    %340 = math.exp %339 : vector<8x128xf32>
    %cst_65 = arith.constant 1.000000e+00 : f32
    %341 = vector.broadcast %cst_65 : f32 to vector<8x128xf32>
    %342 = arith.addf %341, %340 : vector<8x128xf32>
    %343 = arith.divf %341, %342 : vector<8x128xf32>
    %344 = vector.extract_strided_slice %334 {offsets = [0, 128], sizes = [8, 128], strides = [1, 1]} : vector<8x256xf32> to vector<8x128xf32>
    %345 = arith.addf %344, %336 : vector<8x128xf32>
    %346 = arith.negf %345 : vector<8x128xf32>
    %347 = math.exp %346 : vector<8x128xf32>
    %cst_66 = arith.constant 1.000000e+00 : f32
    %348 = vector.broadcast %cst_66 : f32 to vector<8x128xf32>
    %349 = arith.addf %348, %347 : vector<8x128xf32>
    %350 = arith.divf %348, %349 : vector<8x128xf32>
    %351 = vector.extract_strided_slice %343 {offsets = [0, 32], sizes = [8, 32], strides = [1, 1]} : vector<8x128xf32> to vector<8x32xf32>
    %352 = arith.mulf %351, %315 : vector<8x32xf32>
    %353 = vector.extract_strided_slice %343 {offsets = [0, 0], sizes = [8, 32], strides = [1, 1]} : vector<8x128xf32> to vector<8x32xf32>
    %354 = vector.extract_strided_slice %343 {offsets = [0, 64], sizes = [8, 32], strides = [1, 1]} : vector<8x128xf32> to vector<8x32xf32>
    %cst_67 = arith.constant 2.000000e+00 : f32
    %355 = vector.broadcast %cst_67 : f32 to vector<8x32xf32>
    %356 = arith.mulf %355, %354 : vector<8x32xf32>
    %cst_68 = arith.constant 1.000000e+00 : f32
    %357 = vector.broadcast %cst_68 : f32 to vector<8x32xf32>
    %358 = arith.subf %356, %357 : vector<8x32xf32>
    %359 = arith.mulf %353, %358 : vector<8x32xf32>
    %360 = arith.addf %352, %359 : vector<8x32xf32>
    %361 = vector.extract_strided_slice %343 {offsets = [0, 96], sizes = [8, 32], strides = [1, 1]} : vector<8x128xf32> to vector<8x32xf32>
    %362 = math.tanh %360 : vector<8x32xf32>
    %363 = arith.mulf %361, %362 : vector<8x32xf32>
    %364 = vector.extract_strided_slice %350 {offsets = [0, 32], sizes = [8, 32], strides = [1, 1]} : vector<8x128xf32> to vector<8x32xf32>
    %365 = arith.mulf %364, %328 : vector<8x32xf32>
    %366 = vector.extract_strided_slice %350 {offsets = [0, 0], sizes = [8, 32], strides = [1, 1]} : vector<8x128xf32> to vector<8x32xf32>
    %367 = vector.extract_strided_slice %350 {offsets = [0, 64], sizes = [8, 32], strides = [1, 1]} : vector<8x128xf32> to vector<8x32xf32>
    %cst_69 = arith.constant 2.000000e+00 : f32
    %368 = vector.broadcast %cst_69 : f32 to vector<8x32xf32>
    %369 = arith.mulf %368, %367 : vector<8x32xf32>
    %cst_70 = arith.constant 1.000000e+00 : f32
    %370 = vector.broadcast %cst_70 : f32 to vector<8x32xf32>
    %371 = arith.subf %369, %370 : vector<8x32xf32>
    %372 = arith.mulf %366, %371 : vector<8x32xf32>
    %373 = arith.addf %365, %372 : vector<8x32xf32>
    %374 = vector.extract_strided_slice %350 {offsets = [0, 96], sizes = [8, 32], strides = [1, 1]} : vector<8x128xf32> to vector<8x32xf32>
    %375 = math.tanh %373 : vector<8x32xf32>
    %376 = arith.mulf %374, %375 : vector<8x32xf32>
    %377 = tpu.concatenate %363, %376 in 1 : vector<8x32xf32>, vector<8x32xf32> -> vector<8x64xf32>
    %378 = arith.truncf %377 : vector<8x64xf32> to vector<8x64xbf16>
    %c0_71 = arith.constant 0 : index
    %c0_72 = arith.constant 0 : index
    %379 = vector.load %arg7[%c0_71, %c0_72] : memref<64x64xbf16, #tpu.memory_space<vmem>>, vector<64x64xbf16>
    %cst_73 = arith.constant dense<0.000000e+00> : vector<8x64xf32>
    %380 = tpu.matmul %378, %379, %cst_73 {dimension_numbers = #tpu.dot_dimension_numbers<[1], [0], [0], [1], [0, 0, 1, 1], [], []>} : vector<8x64xbf16>, vector<64x64xbf16>, vector<8x64xf32> -> vector<8x64xf32>
    %c0_74 = arith.constant 0 : index
    %c0_75 = arith.constant 0 : index
    %381 = vector.load %arg8[%c0_74, %c0_75] : memref<1x64xf32, #tpu.memory_space<vmem>>, vector<1x64xf32>
    %382 = vector.broadcast %381 : vector<1x64xf32> to vector<8x64xf32>
    %383 = arith.addf %380, %382 : vector<8x64xf32>
    %cst_76 = arith.constant 0.000000e+00 : f32
    %384 = vector.broadcast %cst_76 : f32 to vector<8x64xf32>
    %385 = arith.maximumf %383, %384 : vector<8x64xf32>
    %386 = arith.truncf %385 : vector<8x64xf32> to vector<8x64xbf16>
    %c0_77 = arith.constant 0 : index
    %c0_78 = arith.constant 0 : index
    %387 = vector.load %arg9[%c0_77, %c0_78] : memref<64x128xbf16, #tpu.memory_space<vmem>>, vector<64x128xbf16>
    %cst_79 = arith.constant dense<0.000000e+00> : vector<8x128xf32>
    %388 = tpu.matmul %386, %387, %cst_79 {dimension_numbers = #tpu.dot_dimension_numbers<[1], [0], [0], [1], [0, 0, 1, 1], [], []>} : vector<8x64xbf16>, vector<64x128xbf16>, vector<8x128xf32> -> vector<8x128xf32>
    %c0_80 = arith.constant 0 : index
    %c0_81 = arith.constant 0 : index
    %389 = vector.load %arg10[%c0_80, %c0_81] : memref<1x128xf32, #tpu.memory_space<vmem>>, vector<1x128xf32>
    %390 = vector.broadcast %389 : vector<1x128xf32> to vector<8x128xf32>
    %391 = arith.addf %388, %390 : vector<8x128xf32>
    %c0_82 = arith.constant 0 : index
    %c0_83 = arith.constant 0 : index
    %392 = vector.load %arg11[%c0_82, %c0_83] : memref<8x128xf32, #tpu.memory_space<vmem>>, vector<8x128xf32>
    tpu.vector_store %arg11[%c0_82, %c0_83], %391 {strides = array<i32>} : memref<8x128xf32, #tpu.memory_space<vmem>>, vector<8x128xf32>,
    return
  }
}

</mosaic_0001>

<llo_original>
// kernel: encoder_bilstm_dnn_forward.1
$region0: #{encoder_bilstm_dnn_forward.1}
  #allocation0 [shape = 'u32[]', space=smem, size = 0x4, offset = 0x4, fixed_abs, tag = 'smem constant byte address 0x4 - core index']
  #allocation1 [shape = 'u32[72,128]{1,0:T(1,128)}', space=vmem, size = 0x9000, scoped, tag = 'internal scratch']
  %s0 = inlined_call_operand.vmem [shape: s32[64,1], index: 0, kind: input, shape index: {}]
  %s1 = inlined_call_operand.vmem [shape: bf16[64,32], index: 1, kind: input, shape index: {}]
  %s2 = inlined_call_operand.hbm [shape: bf16[32,32], index: 2, kind: input, shape index: {}]
  %s3 = inlined_call_operand.vmem [shape: f32[1,32], index: 3, kind: input, shape index: {}]
  %s4 = inlined_call_operand.vmem [shape: bf16[32,256], index: 4, kind: input, shape index: {}]
  %s5 = inlined_call_operand.vmem [shape: f32[1,256], index: 5, kind: input, shape index: {}]
  %s6 = inlined_call_operand.vmem [shape: bf16[64,256], index: 6, kind: input, shape index: {}]
  %s7 = inlined_call_operand.vmem [shape: bf16[64,64], index: 7, kind: input, shape index: {}]
  %s8 = inlined_call_operand.vmem [shape: f32[1,64], index: 8, kind: input, shape index: {}]
  %s9 = inlined_call_operand.hbm [shape: bf16[64,128], index: 9, kind: input, shape index: {}]
  %s10 = inlined_call_operand.vmem [shape: f32[1,128], index: 10, kind: input, shape index: {}]
  %s11 = inlined_call_operand.vmem [shape: f32[8,128], index: 11, kind: output, shape index: {}]
  %s12 = sld [smem:[#allocation0]]
  $region62: #{encoder_bilstm_dnn_forward.1} parent=0
    _
  %s14 = ssub.s32 1, %s12
  %s15 = scalar_select 0, %s14, %s12
  $region1: #{encoder_bilstm_dnn_forward.1} parent=0
    #allocation2 [shape = 'u8[8192]{0}', space=vmem, size = 0x2000, scoped, tag = 'input window, operand 2, single buffered']
    #allocation3 [shape = 's32[1]{0}', space=sflag, size = 0x4, scoped, tag = 'scoped memory for encoder_bilstm_dnn_forward.1']
    #allocation4 [shape = 'u8[16384]{0}', space=vmem, size = 0x4000, scoped, tag = 'input window, operand 9, single buffered']
    #allocation5 [shape = 's32[1]{0}', space=sflag, size = 0x4, scoped, tag = 'scoped memory for encoder_bilstm_dnn_forward.1']
    %16 = vsyncpa [#allocation3], 0
    %17 = vsyncpa [#allocation5], 0
    // Predicated region
    $region2: #{encoder_bilstm_dnn_forward.1} parent=1 // pred_check
      _
    $region3: #{encoder_bilstm_dnn_forward.1} parent=1 // pred_check_branch
      %19 = sbr.rel (0) target = $region5
    $region4: #{encoder_bilstm_dnn_forward.1} parent=1 // pred_region
      _
    $region5: #{encoder_bilstm_dnn_forward.1} parent=1 // pred_fallthru
      _
    // Predicated region
    $region6: #{encoder_bilstm_dnn_forward.1} parent=1 // pred_check
      _
    $region7: #{encoder_bilstm_dnn_forward.1} parent=1 // pred_check_branch
      %21 = sbr.rel (0) target = $region9
    $region8: #{encoder_bilstm_dnn_forward.1} parent=1 // pred_region
      _
    $region9: #{encoder_bilstm_dnn_forward.1} parent=1 // pred_fallthru
      _
    // Predicated region
    $region10: #{encoder_bilstm_dnn_forward.1} parent=1 // pred_check
      _
    $region11: #{encoder_bilstm_dnn_forward.1} parent=1 // pred_check_branch
      %23 = sbr.rel (0) target = $region13
    $region12: #{encoder_bilstm_dnn_forward.1} parent=1 // pred_region
      %25 = vsyncadd [#allocation3], 0
      %s26 = sshll.u32 %s2, 4
      %s27 = int_to_ptr.hbm [resolvable:$true] %s26
      %s28 = sshll.u32 [#allocation2], 4
      %s29 = int_to_ptr.vmem [resolvable:$true] %s28
      %34 = dma.hbm_to_vmem [thread:$0]  %s27, 256, %s29, [#allocation3], 64, 64, 4
    $region13: #{encoder_bilstm_dnn_forward.1} parent=1 // pred_fallthru
      _
    // Predicated region
    $region14: #{encoder_bilstm_dnn_forward.1} parent=1 // pred_check
      _
    $region15: #{encoder_bilstm_dnn_forward.1} parent=1 // pred_check_branch
      %36 = sbr.rel (0) target = $region17
    $region16: #{encoder_bilstm_dnn_forward.1} parent=1 // pred_region
      _
    $region17: #{encoder_bilstm_dnn_forward.1} parent=1 // pred_fallthru
      _
    // Predicated region
    $region18: #{encoder_bilstm_dnn_forward.1} parent=1 // pred_check
      _
    $region19: #{encoder_bilstm_dnn_forward.1} parent=1 // pred_check_branch
      %38 = sbr.rel (0) target = $region21
    $region20: #{encoder_bilstm_dnn_forward.1} parent=1 // pred_region
      _
    $region21: #{encoder_bilstm_dnn_forward.1} parent=1 // pred_fallthru
      _
    // Predicated region
    $region22: #{encoder_bilstm_dnn_forward.1} parent=1 // pred_check
      _
    $region23: #{encoder_bilstm_dnn_forward.1} parent=1 // pred_check_branch
      %40 = sbr.rel (0) target = $region25
    $region24: #{encoder_bilstm_dnn_forward.1} parent=1 // pred_region
      _
    $region25: #{encoder_bilstm_dnn_forward.1} parent=1 // pred_fallthru
      _
    // Predicated region
    $region26: #{encoder_bilstm_dnn_forward.1} parent=1 // pred_check
      _
    $region27: #{encoder_bilstm_dnn_forward.1} parent=1 // pred_check_branch
      %42 = sbr.rel (0) target = $region29
    $region28: #{encoder_bilstm_dnn_forward.1} parent=1 // pred_region
      _
    $region29: #{encoder_bilstm_dnn_forward.1} parent=1 // pred_fallthru
      _
    // Predicated region
    $region30: #{encoder_bilstm_dnn_forward.1} parent=1 // pred_check
      _
    $region31: #{encoder_bilstm_dnn_forward.1} parent=1 // pred_check_branch
      %44 = sbr.rel (0) target = $region33
    $region32: #{encoder_bilstm_dnn_forward.1} parent=1 // pred_region
      _
    $region33: #{encoder_bilstm_dnn_forward.1} parent=1 // pred_fallthru
      _
    // Predicated region
    $region34: #{encoder_bilstm_dnn_forward.1} parent=1 // pred_check
      _
    $region35: #{encoder_bilstm_dnn_forward.1} parent=1 // pred_check_branch
      %46 = sbr.rel (0) target = $region37
    $region36: #{encoder_bilstm_dnn_forward.1} parent=1 // pred_region
      _
    $region37: #{encoder_bilstm_dnn_forward.1} parent=1 // pred_fallthru
      _
    // Predicated region
    $region38: #{encoder_bilstm_dnn_forward.1} parent=1 // pred_check
      _
    $region39: #{encoder_bilstm_dnn_forward.1} parent=1 // pred_check_branch
      %48 = sbr.rel (0) target = $region41
    $region40: #{encoder_bilstm_dnn_forward.1} parent=1 // pred_region
      %50 = vsyncadd [#allocation5], 0
      %s51 = sshll.u32 %s9, 4
      %s52 = int_to_ptr.hbm [resolvable:$true] %s51
      %s53 = sshll.u32 [#allocation4], 4
      %s54 = int_to_ptr.vmem [resolvable:$true] %s53
      %59 = dma.hbm_to_vmem [thread:$0]  %s52, 512, %s54, [#allocation5], 64, 64, 4
    $region41: #{encoder_bilstm_dnn_forward.1} parent=1 // pred_fallthru
      _
    // Predicated region
    $region42: #{encoder_bilstm_dnn_forward.1} parent=1 // pred_check
      _
    $region43: #{encoder_bilstm_dnn_forward.1} parent=1 // pred_check_branch
      %61 = sbr.rel (0) target = $region45
    $region44: #{encoder_bilstm_dnn_forward.1} parent=1 // pred_region
      _
    $region45: #{encoder_bilstm_dnn_forward.1} parent=1 // pred_fallthru
      _
    // Predicated region
    $region46: #{encoder_bilstm_dnn_forward.1} parent=1 // pred_check
      _
    $region47: #{encoder_bilstm_dnn_forward.1} parent=1 // pred_check_branch
      %63 = sbr.rel (0) target = $region49
    $region48: #{encoder_bilstm_dnn_forward.1} parent=1 // pred_region
      %65 = dma.done [#allocation3], 256
    $region49: #{encoder_bilstm_dnn_forward.1} parent=1 // pred_fallthru
      _
    // Predicated region
    $region50: #{encoder_bilstm_dnn_forward.1} parent=1 // pred_check
      _
    $region51: #{encoder_bilstm_dnn_forward.1} parent=1 // pred_check_branch
      %67 = sbr.rel (0) target = $region53
    $region52: #{encoder_bilstm_dnn_forward.1} parent=1 // pred_region
      %69 = dma.done [#allocation5], 512
    $region53: #{encoder_bilstm_dnn_forward.1} parent=1 // pred_fallthru
      _
    %v71 = vld [vmem:[%s0] sm:$0xff]
    %v72 = vld [vmem:[%s0 + $0x8] sm:$0xff]
    %v73 = vld [vmem:[%s0 + $0x10] sm:$0xff]
    %v74 = vld [vmem:[%s0 + $0x18] sm:$0xff]
    %v75 = vld [vmem:[%s0 + $0x20] sm:$0xff]
    %v76 = vld [vmem:[%s0 + $0x28] sm:$0xff]
    %v77 = vld [vmem:[%s0 + $0x30] sm:$0xff]
    %v78 = vld [vmem:[%s0 + $0x38] sm:$0xff]
    %v79 = vlaneseq
    %v80 = vand.u32 %v79, 127
    %81 = vset.pattern.permute.xlu0 0
    %82 = vperm.xlu0 %81, %v71
    %v83 = vpop.permute.xlu0 %82
    %84 = vset.pattern.permute.xlu0 0
    %85 = vperm.xlu0 %84, %v72
    %v86 = vpop.permute.xlu0 %85
    %87 = vset.pattern.permute.xlu0 0
    %88 = vperm.xlu0 %87, %v73
    %v89 = vpop.permute.xlu0 %88
    %90 = vset.pattern.permute.xlu0 0
    %91 = vperm.xlu0 %90, %v74
    %v92 = vpop.permute.xlu0 %91
    %93 = vset.pattern.permute.xlu0 0
    %94 = vperm.xlu0 %93, %v75
    %v95 = vpop.permute.xlu0 %94
    %96 = vset.pattern.permute.xlu0 0
    %97 = vperm.xlu0 %96, %v76
    %v98 = vpop.permute.xlu0 %97
    %99 = vset.pattern.permute.xlu0 0
    %100 = vperm.xlu0 %99, %v77
    %v101 = vpop.permute.xlu0 %100
    %102 = vset.pattern.permute.xlu0 0
    %103 = vperm.xlu0 %102, %v78
    %v104 = vpop.permute.xlu0 %103
    %vm105 = vcmp.eq.s32.totalorder %v83, %v80
    %vm106 = vcmp.eq.s32.totalorder %v86, %v80
    %vm107 = vcmp.eq.s32.totalorder %v89, %v80
    %vm108 = vcmp.eq.s32.totalorder %v92, %v80
    %vm109 = vcmp.eq.s32.totalorder %v95, %v80
    %vm110 = vcmp.eq.s32.totalorder %v98, %v80
    %vm111 = vcmp.eq.s32.totalorder %v101, %v80
    %vm112 = vcmp.eq.s32.totalorder %v104, %v80
    %v113 = vsel %vm105, 1, 0
    %v114 = vsel %vm106, 1, 0
    %v115 = vsel %vm107, 1, 0
    %v116 = vsel %vm108, 1, 0
    %v117 = vsel %vm109, 1, 0
    %v118 = vsel %vm110, 1, 0
    %v119 = vsel %vm111, 1, 0
    %v120 = vsel %vm112, 1, 0
    %v121 = vcvt.s32.f32 %v113
    %v122 = vcvt.s32.f32 %v114
    %v123 = vcvt.s32.f32 %v115
    %v124 = vcvt.s32.f32 %v116
    %v125 = vcvt.s32.f32 %v117
    %v126 = vcvt.s32.f32 %v118
    %v127 = vcvt.s32.f32 %v119
    %v128 = vcvt.s32.f32 %v120
    %v129 = vpack.c.bf16 %v122, %v121
    %v130 = vpack.c.bf16 %v124, %v123
    %v131 = vpack.c.bf16 %v126, %v125
    %v132 = vpack.c.bf16 %v128, %v127
    %v133 = vld [vmem:[%s1] sm:$0xf]
    %v134 = vld [vmem:[%s1 + $0x4] sm:$0xf]
    %v135 = vld [vmem:[%s1 + $0x8] sm:$0xf]
    %v136 = vld [vmem:[%s1 + $0xc] sm:$0xf]
    %v137 = vld [vmem:[%s1 + $0x10] sm:$0xf]
    %v138 = vld [vmem:[%s1 + $0x14] sm:$0xf]
    %v139 = vld [vmem:[%s1 + $0x18] sm:$0xf]
    %v140 = vld [vmem:[%s1 + $0x1c] sm:$0xf]
    %v149 = vunpack.c.l.b16 %v133
    %v150 = vunpack.c.l.b16 %v134
    %v151 = vunpack.c.l.b16 %v135
    %v152 = vunpack.c.l.b16 %v136
    %v153 = vunpack.c.l.b16 %v137
    %v154 = vunpack.c.l.b16 %v138
    %v155 = vunpack.c.l.b16 %v139
    %v156 = vunpack.c.l.b16 %v140
    %v157 = vpack.c.b16 %v150, %v149
    %v158 = vpack.c.b16 %v152, %v151
    %v159 = vpack.c.b16 %v154, %v153
    %v160 = vpack.c.b16 %v156, %v155
    %vm165 = vcmask 523264
    %v167 = vsel %vm165, %v129, 0
    %v170 = vsel %vm165, %v130, 0
    %v173 = vsel %vm165, %v131, 0
    %v176 = vsel %vm165, %v132, 0
    %178 = vmatpush.bf16.msra.mxu0 0
    %179 = vmatpush.bf16.msra.mxu0 0
    %180 = vmatpush.bf16.msra.mxu0 0
    %181 = vmatpush.bf16.msra.mxu0 0
    %182 = vmatpush.bf16.msra.mxu0 %v160
    %183 = vmatpush.bf16.msra.mxu0 %v159
    %184 = vmatpush.bf16.msra.mxu0 %v158
    %185 = vmatpush.bf16.msra.mxu0 %v157
    %186 = vmatmul.bf16.gmra.mxu0 %v167
    %v187 = vpop.f32.mrf.mxu0
    %v188 = vadd.f32 0.0, %v187
    %v189 = vpop.f32.mrf.mxu0
    %v190 = vadd.f32 0.0, %v189
    %191 = vmatmul.bf16.gmra.mxu0 %v170
    %v192 = vpop.f32.mrf.mxu0
    %v193 = vadd.f32 0.0, %v192
    %v194 = vpop.f32.mrf.mxu0
    %v195 = vadd.f32 0.0, %v194
    %196 = vmatmul.bf16.gmra.mxu0 %v173
    %v197 = vpop.f32.mrf.mxu0
    %v198 = vadd.f32 0.0, %v197
    %v199 = vpop.f32.mrf.mxu0
    %v200 = vadd.f32 0.0, %v199
    %201 = vmatmul.bf16.gmra.mxu0 %v176
    %v202 = vpop.f32.mrf.mxu0
    %v203 = vadd.f32 0.0, %v202
    %v204 = vpop.f32.mrf.mxu0
    %v205 = vadd.f32 0.0, %v204
    %206 = vdwg.mxu0
    %v207 = vpack.c.bf16 %v190, %v188
    %v208 = vpack.c.bf16 %v195, %v193
    %v209 = vpack.c.bf16 %v200, %v198
    %v210 = vpack.c.bf16 %v205, %v203
    %v211 = vld [vmem:[#allocation2] sm:$0xf]
    %v212 = vld [vmem:[#allocation2 + $0x4] sm:$0xf]
    %v213 = vld [vmem:[#allocation2 + $0x8] sm:$0xf]
    %v214 = vld [vmem:[#allocation2 + $0xc] sm:$0xf]
    %v215 = vld [vmem:[%s3] sm:$0x1]
    %v217 = vperm.slane %v215, 0
    %v223 = vunpack.c.l.b16 %v211
    %v224 = vunpack.c.l.b16 %v212
    %v225 = vunpack.c.l.b16 %v213
    %v226 = vunpack.c.l.b16 %v214
    %v227 = vpack.c.b16 %v224, %v223
    %v228 = vpack.c.b16 %v226, %v225
    %vm231 = vcmask 261120
    %v233 = vsel %vm231, %v207, 0
    %v236 = vsel %vm231, %v208, 0
    %v239 = vsel %vm231, %v209, 0
    %v242 = vsel %vm231, %v210, 0
    %244 = vmatpush.bf16.msra.mxu0 0
    %245 = vmatpush.bf16.msra.mxu0 0
    %246 = vmatpush.bf16.msra.mxu0 0
    %247 = vmatpush.bf16.msra.mxu0 0
    %248 = vmatpush.bf16.msra.mxu0 0
    %249 = vmatpush.bf16.msra.mxu0 0
    %250 = vmatpush.bf16.msra.mxu0 %v228
    %251 = vmatpush.bf16.msra.mxu0 %v227
    %252 = vmatmul.bf16.gmra.mxu0 %v233
    %v253 = vpop.f32.mrf.mxu0
    %v254 = vadd.f32 %v217, %v253
    %v255 = vpop.f32.mrf.mxu0
    %v256 = vadd.f32 %v217, %v255
    %257 = vmatmul.bf16.gmra.mxu0 %v236
    %v258 = vpop.f32.mrf.mxu0
    %v259 = vadd.f32 %v217, %v258
    %v260 = vpop.f32.mrf.mxu0
    %v261 = vadd.f32 %v217, %v260
    %262 = vmatmul.bf16.gmra.mxu0 %v239
    %v263 = vpop.f32.mrf.mxu0
    %v264 = vadd.f32 %v217, %v263
    %v265 = vpop.f32.mrf.mxu0
    %v266 = vadd.f32 %v217, %v265
    %267 = vmatmul.bf16.gmra.mxu0 %v242
    %v268 = vpop.f32.mrf.mxu0
    %v269 = vadd.f32 %v217, %v268
    %v270 = vpop.f32.mrf.mxu0
    %v271 = vadd.f32 %v217, %v270
    %272 = vdwg.mxu0
    %v273 = vtanh.pop %v254
    %v274 = vtanh.pop %v256
    %v275 = vtanh.pop %v259
    %v276 = vtanh.pop %v261
    %v277 = vtanh.pop %v264
    %v278 = vtanh.pop %v266
    %v279 = vtanh.pop %v269
    %v280 = vtanh.pop %v271
    %v281 = vpack.c.bf16 %v274, %v273
    %v282 = vpack.c.bf16 %v276, %v275
    %v283 = vpack.c.bf16 %v278, %v277
    %v284 = vpack.c.bf16 %v280, %v279
    %v285 = vld [vmem:[%s4] sm:$0xff]
    %v286 = vld [vmem:[%s4 + $0x8] sm:$0xff]
    %v287 = vld [vmem:[%s4 + $0x10] sm:$0xff]
    %v288 = vld [vmem:[%s4 + $0x18] sm:$0xff]
    %v289 = vld [vmem:[%s5] sm:$0x3]
    %v291 = vperm.slane %v289, 0
    %v292 = vperm.slane %v289, 1
    %v299 = vunpack.c.l.b16 %v285
    %v300 = vunpack.c.h.b16 %v285
    %v301 = vunpack.c.l.b16 %v286
    %v302 = vunpack.c.h.b16 %v286
    %v303 = vunpack.c.l.b16 %v287
    %v304 = vunpack.c.h.b16 %v287
    %v305 = vunpack.c.l.b16 %v288
    %v306 = vunpack.c.h.b16 %v288
    %v307 = vpack.c.b16 %v301, %v299
    %v308 = vpack.c.b16 %v302, %v300
    %v309 = vpack.c.b16 %v305, %v303
    %v310 = vpack.c.b16 %v306, %v304
    %v316 = vsel %vm231, %v281, 0
    %v319 = vsel %vm231, %v282, 0
    %v322 = vsel %vm231, %v283, 0
    %v325 = vsel %vm231, %v284, 0
    %327 = vmatpush.bf16.msra.mxu0 0
    %328 = vmatpush.bf16.msra.mxu0 0
    %329 = vmatpush.bf16.msra.mxu0 0
    %330 = vmatpush.bf16.msra.mxu0 0
    %331 = vmatpush.bf16.msra.mxu0 0
    %332 = vmatpush.bf16.msra.mxu0 0
    %333 = vmatpush.bf16.msra.mxu0 %v309
    %334 = vmatpush.bf16.msra.mxu0 %v307
    %335 = vmatmul.bf16.gmra.mxu0 %v316
    %v336 = vpop.f32.mrf.mxu0
    %v337 = vadd.f32 %v291, %v336
    %v338 = vpop.f32.mrf.mxu0
    %v339 = vadd.f32 %v291, %v338
    %340 = vmatmul.bf16.gmra.mxu0 %v319
    %v341 = vpop.f32.mrf.mxu0
    %v342 = vadd.f32 %v291, %v341
    %v343 = vpop.f32.mrf.mxu0
    %v344 = vadd.f32 %v291, %v343
    %345 = vmatmul.bf16.gmra.mxu0 %v322
    %v346 = vpop.f32.mrf.mxu0
    %v347 = vadd.f32 %v291, %v346
    %v348 = vpop.f32.mrf.mxu0
    %v349 = vadd.f32 %v291, %v348
    %350 = vmatmul.bf16.gmra.mxu0 %v325
    %v351 = vpop.f32.mrf.mxu0
    %v352 = vadd.f32 %v291, %v351
    %v353 = vpop.f32.mrf.mxu0
    %v354 = vadd.f32 %v291, %v353
    %355 = vdwg.mxu0
    %356 = vmatpush.bf16.msra.mxu0 0
    %357 = vmatpush.bf16.msra.mxu0 0
    %358 = vmatpush.bf16.msra.mxu0 0
    %359 = vmatpush.bf16.msra.mxu0 0
    %360 = vmatpush.bf16.msra.mxu0 0
    %361 = vmatpush.bf16.msra.mxu0 0
    %362 = vmatpush.bf16.msra.mxu0 %v310
    %363 = vmatpush.bf16.msra.mxu0 %v308
    %364 = vmatmul.bf16.gmra.mxu0 %v316
    %v365 = vpop.f32.mrf.mxu0
    %v366 = vadd.f32 %v292, %v365
    %v367 = vpop.f32.mrf.mxu0
    %v368 = vadd.f32 %v292, %v367
    %369 = vmatmul.bf16.gmra.mxu0 %v319
    %v370 = vpop.f32.mrf.mxu0
    %v371 = vadd.f32 %v292, %v370
    %v372 = vpop.f32.mrf.mxu0
    %v373 = vadd.f32 %v292, %v372
    %374 = vmatmul.bf16.gmra.mxu0 %v322
    %v375 = vpop.f32.mrf.mxu0
    %v376 = vadd.f32 %v292, %v375
    %v377 = vpop.f32.mrf.mxu0
    %v378 = vadd.f32 %v292, %v377
    %379 = vmatmul.bf16.gmra.mxu0 %v325
    %v380 = vpop.f32.mrf.mxu0
    %v381 = vadd.f32 %v292, %v380
    %v382 = vpop.f32.mrf.mxu0
    %v383 = vadd.f32 %v292, %v382
    %384 = vdwg.mxu0
    %v385 = vld [vmem:[%s6] sm:$0xff]
    %v386 = vld [vmem:[%s6 + $0x8] sm:$0xff]
    %v387 = vld [vmem:[%s6 + $0x10] sm:$0xff]
    %v388 = vld [vmem:[%s6 + $0x18] sm:$0xff]
    %v389 = vld [vmem:[%s6 + $0x20] sm:$0xff]
    %v390 = vld [vmem:[%s6 + $0x28] sm:$0xff]
    %v391 = vld [vmem:[%s6 + $0x30] sm:$0xff]
    %v392 = vld [vmem:[%s6 + $0x38] sm:$0xff]
    %v393 = vxor.u32 %v337, 2147483648
    %v394 = vmul.f32 %v393, 1.442695
    %v395 = vpow.pop %v394
    %v396 = vadd.f32 %v395, 1.0
    %v397 = vrcp.pop %v396
    %v398 = vmul.f32 %v396, %v397
    %v399 = vsub.f32 1.0, %v398
    %v400 = vmul.f32 %v397, %v399
    %v401 = vadd.f32 %v397, %v400
    %vm402 = vweird.f32 %v396
    %vm403 = vweird.f32 %v397
    %vm404 = vmor %vm402, %vm403
    %v405 = vsel %vm404, %v397, %v401
    %v406 = vand.u32 2147483647, %v396
    %vm407 = vcmp.eq.f32.partialorder %v406, 8.507059e+37
    %v408 = vand.u32 %v396, 2147483648
    %v409 = vor.u32 1.1754944e-38, %v408
    %v410 = vsel %vm407, %v409, %v405
    %v411 = vmul.f32 1.0, %v410
    %v412 = vxor.u32 %v383, 2147483648
    %v413 = vmul.f32 %v412, 1.442695
    %v414 = vpow.pop %v413
    %v415 = vadd.f32 %v414, 1.0
    %v416 = vrcp.pop %v415
    %v417 = vmul.f32 %v415, %v416
    %v418 = vsub.f32 1.0, %v417
    %v419 = vmul.f32 %v416, %v418
    %v420 = vadd.f32 %v416, %v419
    %vm421 = vweird.f32 %v415
    %vm422 = vweird.f32 %v416
    %vm423 = vmor %vm421, %vm422
    %v424 = vsel %vm423, %v416, %v420
    %v425 = vand.u32 2147483647, %v415
    %vm426 = vcmp.eq.f32.partialorder %v425, 8.507059e+37
    %v427 = vand.u32 %v415, 2147483648
    %v428 = vor.u32 1.1754944e-38, %v427
    %v429 = vsel %vm426, %v428, %v424
    %v430 = vmul.f32 1.0, %v429
    %v431 = vmul.f32 %v411, 0.0
    %v432 = vmul.f32 %v411, 2.0
    %v433 = vsub.f32 %v432, 1.0
    %435 = vrot.lane.b32.xlu0 %v433, 64
    %v436 = vpop.permute.xlu0 %435
    %v438 = vmul.f32 %v411, %v436
    %440 = vrot.lane.b32.xlu0 %v438, 32
    %v441 = vpop.permute.xlu0 %440
    %v443 = vadd.f32 %v431, %v441
    %v444 = vtanh.pop %v443
    %446 = vrot.lane.b32.xlu0 %v444, 64
    %v447 = vpop.permute.xlu0 %446
    %v449 = vmul.f32 %v411, %v447
    %v450 = vmul.f32 %v430, 0.0
    %v451 = vmul.f32 %v430, 2.0
    %v452 = vsub.f32 %v451, 1.0
    %454 = vrot.lane.b32.xlu0 %v452, 64
    %v455 = vpop.permute.xlu0 %454
    %v457 = vmul.f32 %v430, %v455
    %459 = vrot.lane.b32.xlu0 %v457, 32
    %v460 = vpop.permute.xlu0 %459
    %v462 = vadd.f32 %v450, %v460
    %v463 = vtanh.pop %v462
    %465 = vrot.lane.b32.xlu0 %v463, 64
    %v466 = vpop.permute.xlu0 %465
    %v468 = vmul.f32 %v430, %v466
    %470 = vrot.lane.b32.xlu0 %v449, 32
    %v471 = vpop.permute.xlu0 %470
    %474 = vrot.lane.b32.xlu0 %v468, 64
    %v475 = vpop.permute.xlu0 %474
    %v477 = vsel %vm231, %v471, %v475
    %v478 = vpack.c.bf16 %v477, %v477
    %v487 = vunpack.c.l.b16 %v385
    %v488 = vunpack.c.h.b16 %v385
    %v489 = vunpack.c.l.b16 %v386
    %v490 = vunpack.c.h.b16 %v386
    %v491 = vunpack.c.l.b16 %v387
    %v492 = vunpack.c.h.b16 %v387
    %v493 = vunpack.c.l.b16 %v388
    %v494 = vunpack.c.h.b16 %v388
    %v495 = vunpack.c.l.b16 %v389
    %v496 = vunpack.c.h.b16 %v389
    %v497 = vunpack.c.l.b16 %v390
    %v498 = vunpack.c.h.b16 %v390
    %v499 = vunpack.c.l.b16 %v391
    %v500 = vunpack.c.h.b16 %v391
    %v501 = vunpack.c.l.b16 %v392
    %v502 = vunpack.c.h.b16 %v392
    %v503 = vpack.c.b16 %v489, %v487
    %v504 = vpack.c.b16 %v490, %v488
    %v505 = vpack.c.b16 %v493, %v491
    %v506 = vpack.c.b16 %v494, %v492
    %v507 = vpack.c.b16 %v497, %v495
    %v508 = vpack.c.b16 %v498, %v496
    %v509 = vpack.c.b16 %v501, %v499
    %v510 = vpack.c.b16 %v502, %v500
    %v520 = vsel %vm165, %v478, 0
    %522 = vmatpush.bf16.msra.mxu0 0
    %523 = vmatpush.bf16.msra.mxu0 0
    %524 = vmatpush.bf16.msra.mxu0 0
    %525 = vmatpush.bf16.msra.mxu0 0
    %526 = vmatpush.bf16.msra.mxu0 %v509
    %527 = vmatpush.bf16.msra.mxu0 %v507
    %528 = vmatpush.bf16.msra.mxu0 %v505
    %529 = vmatpush.bf16.msra.mxu0 %v503
    %530 = vmatmul.bf16.gmra.mxu0 %v520
    %v531 = vpop.f32.mrf.mxu0
    %v532 = vadd.f32 0.0, %v531
    %v533 = vpop.f32.mrf.mxu0
    %534 = vdwg.mxu0
    %535 = vmatpush.bf16.msra.mxu0 0
    %536 = vmatpush.bf16.msra.mxu0 0
    %537 = vmatpush.bf16.msra.mxu0 0
    %538 = vmatpush.bf16.msra.mxu0 0
    %539 = vmatpush.bf16.msra.mxu0 %v510
    %540 = vmatpush.bf16.msra.mxu0 %v508
    %541 = vmatpush.bf16.msra.mxu0 %v506
    %542 = vmatpush.bf16.msra.mxu0 %v504
    %543 = vmatmul.bf16.gmra.mxu0 %v520
    %v544 = vpop.f32.mrf.mxu0
    %v545 = vadd.f32 0.0, %v544
    %v546 = vpop.f32.mrf.mxu0
    %547 = vdwg.mxu0
    %v548 = vadd.f32 %v532, %v339
    %v549 = vxor.u32 %v548, 2147483648
    %v550 = vmul.f32 %v549, 1.442695
    %v551 = vpow.pop %v550
    %v552 = vadd.f32 %v551, 1.0
    %v553 = vrcp.pop %v552
    %v554 = vmul.f32 %v552, %v553
    %v555 = vsub.f32 1.0, %v554
    %v556 = vmul.f32 %v553, %v555
    %v557 = vadd.f32 %v553, %v556
    %vm558 = vweird.f32 %v552
    %vm559 = vweird.f32 %v553
    %vm560 = vmor %vm558, %vm559
    %v561 = vsel %vm560, %v553, %v557
    %v562 = vand.u32 2147483647, %v552
    %vm563 = vcmp.eq.f32.partialorder %v562, 8.507059e+37
    %v564 = vand.u32 %v552, 2147483648
    %v565 = vor.u32 1.1754944e-38, %v564
    %v566 = vsel %vm563, %v565, %v561
    %v567 = vmul.f32 1.0, %v566
    %v568 = vadd.f32 %v545, %v381
    %v569 = vxor.u32 %v568, 2147483648
    %v570 = vmul.f32 %v569, 1.442695
    %v571 = vpow.pop %v570
    %v572 = vadd.f32 %v571, 1.0
    %v573 = vrcp.pop %v572
    %v574 = vmul.f32 %v572, %v573
    %v575 = vsub.f32 1.0, %v574
    %v576 = vmul.f32 %v573, %v575
    %v577 = vadd.f32 %v573, %v576
    %vm578 = vweird.f32 %v572
    %vm579 = vweird.f32 %v573
    %vm580 = vmor %vm578, %vm579
    %v581 = vsel %vm580, %v573, %v577
    %v582 = vand.u32 2147483647, %v572
    %vm583 = vcmp.eq.f32.partialorder %v582, 8.507059e+37
    %v584 = vand.u32 %v572, 2147483648
    %v585 = vor.u32 1.1754944e-38, %v584
    %v586 = vsel %vm583, %v585, %v581
    %v587 = vmul.f32 1.0, %v586
    %v588 = vmul.f32 %v567, %v443
    %v589 = vmul.f32 %v567, 2.0
    %v590 = vsub.f32 %v589, 1.0
    %592 = vrot.lane.b32.xlu0 %v590, 64
    %v593 = vpop.permute.xlu0 %592
    %v595 = vmul.f32 %v567, %v593
    %597 = vrot.lane.b32.xlu0 %v595, 32
    %v598 = vpop.permute.xlu0 %597
    %v600 = vadd.f32 %v588, %v598
    %v601 = vtanh.pop %v600
    %603 = vrot.lane.b32.xlu0 %v601, 64
    %v604 = vpop.permute.xlu0 %603
    %v606 = vmul.f32 %v567, %v604
    %v607 = vmul.f32 %v587, %v462
    %v608 = vmul.f32 %v587, 2.0
    %v609 = vsub.f32 %v608, 1.0
    %611 = vrot.lane.b32.xlu0 %v609, 64
    %v612 = vpop.permute.xlu0 %611
    %v614 = vmul.f32 %v587, %v612
    %616 = vrot.lane.b32.xlu0 %v614, 32
    %v617 = vpop.permute.xlu0 %616
    %v619 = vadd.f32 %v607, %v617
    %v620 = vtanh.pop %v619
    %622 = vrot.lane.b32.xlu0 %v620, 64
    %v623 = vpop.permute.xlu0 %622
    %v625 = vmul.f32 %v587, %v623
    %627 = vrot.lane.b32.xlu0 %v606, 32
    %v628 = vpop.permute.xlu0 %627
    %631 = vrot.lane.b32.xlu0 %v625, 64
    %v632 = vpop.permute.xlu0 %631
    %v634 = vsel %vm231, %v628, %v632
    %v635 = vpack.c.bf16 %v634, %v634
    %v637 = vsel %vm165, %v635, 0
    %639 = vmatpush.bf16.msra.mxu0 0
    %640 = vmatpush.bf16.msra.mxu0 0
    %641 = vmatpush.bf16.msra.mxu0 0
    %642 = vmatpush.bf16.msra.mxu0 0
    %643 = vmatpush.bf16.msra.mxu0 %v509
    %644 = vmatpush.bf16.msra.mxu0 %v507
    %645 = vmatpush.bf16.msra.mxu0 %v505
    %646 = vmatpush.bf16.msra.mxu0 %v503
    %647 = vmatmul.bf16.gmra.mxu0 %v637
    %v648 = vpop.f32.mrf.mxu0
    %v649 = vadd.f32 0.0, %v648
    %v650 = vpop.f32.mrf.mxu0
    %651 = vdwg.mxu0
    %652 = vmatpush.bf16.msra.mxu0 0
    %653 = vmatpush.bf16.msra.mxu0 0
    %654 = vmatpush.bf16.msra.mxu0 0
    %655 = vmatpush.bf16.msra.mxu0 0
    %656 = vmatpush.bf16.msra.mxu0 %v510
    %657 = vmatpush.bf16.msra.mxu0 %v508
    %658 = vmatpush.bf16.msra.mxu0 %v506
    %659 = vmatpush.bf16.msra.mxu0 %v504
    %660 = vmatmul.bf16.gmra.mxu0 %v637
    %v661 = vpop.f32.mrf.mxu0
    %v662 = vadd.f32 0.0, %v661
    %v663 = vpop.f32.mrf.mxu0
    %664 = vdwg.mxu0
    %v665 = vadd.f32 %v649, %v342
    %v666 = vxor.u32 %v665, 2147483648
    %v667 = vmul.f32 %v666, 1.442695
    %v668 = vpow.pop %v667
    %v669 = vadd.f32 %v668, 1.0
    %v670 = vrcp.pop %v669
    %v671 = vmul.f32 %v669, %v670
    %v672 = vsub.f32 1.0, %v671
    %v673 = vmul.f32 %v670, %v672
    %v674 = vadd.f32 %v670, %v673
    %vm675 = vweird.f32 %v669
    %vm676 = vweird.f32 %v670
    %vm677 = vmor %vm675, %vm676
    %v678 = vsel %vm677, %v670, %v674
    %v679 = vand.u32 2147483647, %v669
    %vm680 = vcmp.eq.f32.partialorder %v679, 8.507059e+37
    %v681 = vand.u32 %v669, 2147483648
    %v682 = vor.u32 1.1754944e-38, %v681
    %v683 = vsel %vm680, %v682, %v678
    %v684 = vmul.f32 1.0, %v683
    %v685 = vadd.f32 %v662, %v378
    %v686 = vxor.u32 %v685, 2147483648
    %v687 = vmul.f32 %v686, 1.442695
    %v688 = vpow.pop %v687
    %v689 = vadd.f32 %v688, 1.0
    %v690 = vrcp.pop %v689
    %v691 = vmul.f32 %v689, %v690
    %v692 = vsub.f32 1.0, %v691
    %v693 = vmul.f32 %v690, %v692
    %v694 = vadd.f32 %v690, %v693
    %vm695 = vweird.f32 %v689
    %vm696 = vweird.f32 %v690
    %vm697 = vmor %vm695, %vm696
    %v698 = vsel %vm697, %v690, %v694
    %v699 = vand.u32 2147483647, %v689
    %vm700 = vcmp.eq.f32.partialorder %v699, 8.507059e+37
    %v701 = vand.u32 %v689, 2147483648
    %v702 = vor.u32 1.1754944e-38, %v701
    %v703 = vsel %vm700, %v702, %v698
    %v704 = vmul.f32 1.0, %v703
    %v705 = vmul.f32 %v684, %v600
    %v706 = vmul.f32 %v684, 2.0
    %v707 = vsub.f32 %v706, 1.0
    %709 = vrot.lane.b32.xlu0 %v707, 64
    %v710 = vpop.permute.xlu0 %709
    %v712 = vmul.f32 %v684, %v710
    %714 = vrot.lane.b32.xlu0 %v712, 32
    %v715 = vpop.permute.xlu0 %714
    %v717 = vadd.f32 %v705, %v715
    %v718 = vtanh.pop %v717
    %720 = vrot.lane.b32.xlu0 %v718, 64
    %v721 = vpop.permute.xlu0 %720
    %v723 = vmul.f32 %v684, %v721
    %v724 = vmul.f32 %v704, %v619
    %v725 = vmul.f32 %v704, 2.0
    %v726 = vsub.f32 %v725, 1.0
    %728 = vrot.lane.b32.xlu0 %v726, 64
    %v729 = vpop.permute.xlu0 %728
    %v731 = vmul.f32 %v704, %v729
    %733 = vrot.lane.b32.xlu0 %v731, 32
    %v734 = vpop.permute.xlu0 %733
    %v736 = vadd.f32 %v724, %v734
    %v737 = vtanh.pop %v736
    %739 = vrot.lane.b32.xlu0 %v737, 64
    %v740 = vpop.permute.xlu0 %739
    %v742 = vmul.f32 %v704, %v740
    %744 = vrot.lane.b32.xlu0 %v723, 32
    %v745 = vpop.permute.xlu0 %744
    %748 = vrot.lane.b32.xlu0 %v742, 64
    %v749 = vpop.permute.xlu0 %748
    %v751 = vsel %vm231, %v745, %v749
    %v752 = vpack.c.bf16 %v751, %v751
    %v754 = vsel %vm165, %v752, 0
    %756 = vmatpush.bf16.msra.mxu0 0
    %757 = vmatpush.bf16.msra.mxu0 0
    %758 = vmatpush.bf16.msra.mxu0 0
    %759 = vmatpush.bf16.msra.mxu0 0
    %760 = vmatpush.bf16.msra.mxu0 %v509
    %761 = vmatpush.bf16.msra.mxu0 %v507
    %762 = vmatpush.bf16.msra.mxu0 %v505
    %763 = vmatpush.bf16.msra.mxu0 %v503
    %764 = vmatmul.bf16.gmra.mxu0 %v754
    %v765 = vpop.f32.mrf.mxu0
    %v766 = vadd.f32 0.0, %v765
    %v767 = vpop.f32.mrf.mxu0
    %768 = vdwg.mxu0
    %769 = vmatpush.bf16.msra.mxu0 0
    %770 = vmatpush.bf16.msra.mxu0 0
    %771 = vmatpush.bf16.msra.mxu0 0
    %772 = vmatpush.bf16.msra.mxu0 0
    %773 = vmatpush.bf16.msra.mxu0 %v510
    %774 = vmatpush.bf16.msra.mxu0 %v508
    %775 = vmatpush.bf16.msra.mxu0 %v506
    %776 = vmatpush.bf16.msra.mxu0 %v504
    %777 = vmatmul.bf16.gmra.mxu0 %v754
    %v778 = vpop.f32.mrf.mxu0
    %v779 = vadd.f32 0.0, %v778
    %v780 = vpop.f32.mrf.mxu0
    %781 = vdwg.mxu0
    %v782 = vadd.f32 %v766, %v344
    %v783 = vxor.u32 %v782, 2147483648
    %v784 = vmul.f32 %v783, 1.442695
    %v785 = vpow.pop %v784
    %v786 = vadd.f32 %v785, 1.0
    %v787 = vrcp.pop %v786
    %v788 = vmul.f32 %v786, %v787
    %v789 = vsub.f32 1.0, %v788
    %v790 = vmul.f32 %v787, %v789
    %v791 = vadd.f32 %v787, %v790
    %vm792 = vweird.f32 %v786
    %vm793 = vweird.f32 %v787
    %vm794 = vmor %vm792, %vm793
    %v795 = vsel %vm794, %v787, %v791
    %v796 = vand.u32 2147483647, %v786
    %vm797 = vcmp.eq.f32.partialorder %v796, 8.507059e+37
    %v798 = vand.u32 %v786, 2147483648
    %v799 = vor.u32 1.1754944e-38, %v798
    %v800 = vsel %vm797, %v799, %v795
    %v801 = vmul.f32 1.0, %v800
    %v802 = vadd.f32 %v779, %v376
    %v803 = vxor.u32 %v802, 2147483648
    %v804 = vmul.f32 %v803, 1.442695
    %v805 = vpow.pop %v804
    %v806 = vadd.f32 %v805, 1.0
    %v807 = vrcp.pop %v806
    %v808 = vmul.f32 %v806, %v807
    %v809 = vsub.f32 1.0, %v808
    %v810 = vmul.f32 %v807, %v809
    %v811 = vadd.f32 %v807, %v810
    %vm812 = vweird.f32 %v806
    %vm813 = vweird.f32 %v807
    %vm814 = vmor %vm812, %vm813
    %v815 = vsel %vm814, %v807, %v811
    %v816 = vand.u32 2147483647, %v806
    %vm817 = vcmp.eq.f32.partialorder %v816, 8.507059e+37
    %v818 = vand.u32 %v806, 2147483648
    %v819 = vor.u32 1.1754944e-38, %v818
    %v820 = vsel %vm817, %v819, %v815
    %v821 = vmul.f32 1.0, %v820
    %v822 = vmul.f32 %v801, %v717
    %v823 = vmul.f32 %v801, 2.0
    %v824 = vsub.f32 %v823, 1.0
    %826 = vrot.lane.b32.xlu0 %v824, 64
    %v827 = vpop.permute.xlu0 %826
    %v829 = vmul.f32 %v801, %v827
    %831 = vrot.lane.b32.xlu0 %v829, 32
    %v832 = vpop.permute.xlu0 %831
    %v834 = vadd.f32 %v822, %v832
    %v835 = vtanh.pop %v834
    %837 = vrot.lane.b32.xlu0 %v835, 64
    %v838 = vpop.permute.xlu0 %837
    %v840 = vmul.f32 %v801, %v838
    %v841 = vmul.f32 %v821, %v736
    %v842 = vmul.f32 %v821, 2.0
    %v843 = vsub.f32 %v842, 1.0
    %845 = vrot.lane.b32.xlu0 %v843, 64
    %v846 = vpop.permute.xlu0 %845
    %v848 = vmul.f32 %v821, %v846
    %850 = vrot.lane.b32.xlu0 %v848, 32
    %v851 = vpop.permute.xlu0 %850
    %v853 = vadd.f32 %v841, %v851
    %v854 = vtanh.pop %v853
    %856 = vrot.lane.b32.xlu0 %v854, 64
    %v857 = vpop.permute.xlu0 %856
    %v859 = vmul.f32 %v821, %v857
    %861 = vrot.lane.b32.xlu0 %v840, 32
    %v862 = vpop.permute.xlu0 %861
    %865 = vrot.lane.b32.xlu0 %v859, 64
    %v866 = vpop.permute.xlu0 %865
    %v868 = vsel %vm231, %v862, %v866
    %v869 = vpack.c.bf16 %v868, %v868
    %v871 = vsel %vm165, %v869, 0
    %873 = vmatpush.bf16.msra.mxu0 0
    %874 = vmatpush.bf16.msra.mxu0 0
    %875 = vmatpush.bf16.msra.mxu0 0
    %876 = vmatpush.bf16.msra.mxu0 0
    %877 = vmatpush.bf16.msra.mxu0 %v509
    %878 = vmatpush.bf16.msra.mxu0 %v507
    %879 = vmatpush.bf16.msra.mxu0 %v505
    %880 = vmatpush.bf16.msra.mxu0 %v503
    %881 = vmatmul.bf16.gmra.mxu0 %v871
    %v882 = vpop.f32.mrf.mxu0
    %v883 = vadd.f32 0.0, %v882
    %v884 = vpop.f32.mrf.mxu0
    %885 = vdwg.mxu0
    %886 = vmatpush.bf16.msra.mxu0 0
    %887 = vmatpush.bf16.msra.mxu0 0
    %888 = vmatpush.bf16.msra.mxu0 0
    %889 = vmatpush.bf16.msra.mxu0 0
    %890 = vmatpush.bf16.msra.mxu0 %v510
    %891 = vmatpush.bf16.msra.mxu0 %v508
    %892 = vmatpush.bf16.msra.mxu0 %v506
    %893 = vmatpush.bf16.msra.mxu0 %v504
    %894 = vmatmul.bf16.gmra.mxu0 %v871
    %v895 = vpop.f32.mrf.mxu0
    %v896 = vadd.f32 0.0, %v895
    %v897 = vpop.f32.mrf.mxu0
    %898 = vdwg.mxu0
    %v899 = vadd.f32 %v883, %v347
    %v900 = vxor.u32 %v899, 2147483648
    %v901 = vmul.f32 %v900, 1.442695
    %v902 = vpow.pop %v901
    %v903 = vadd.f32 %v902, 1.0
    %v904 = vrcp.pop %v903
    %v905 = vmul.f32 %v903, %v904
    %v906 = vsub.f32 1.0, %v905
    %v907 = vmul.f32 %v904, %v906
    %v908 = vadd.f32 %v904, %v907
    %vm909 = vweird.f32 %v903
    %vm910 = vweird.f32 %v904
    %vm911 = vmor %vm909, %vm910
    %v912 = vsel %vm911, %v904, %v908
    %v913 = vand.u32 2147483647, %v903
    %vm914 = vcmp.eq.f32.partialorder %v913, 8.507059e+37
    %v915 = vand.u32 %v903, 2147483648
    %v916 = vor.u32 1.1754944e-38, %v915
    %v917 = vsel %vm914, %v916, %v912
    %v918 = vmul.f32 1.0, %v917
    %v919 = vadd.f32 %v896, %v373
    %v920 = vxor.u32 %v919, 2147483648
    %v921 = vmul.f32 %v920, 1.442695
    %v922 = vpow.pop %v921
    %v923 = vadd.f32 %v922, 1.0
    %v924 = vrcp.pop %v923
    %v925 = vmul.f32 %v923, %v924
    %v926 = vsub.f32 1.0, %v925
    %v927 = vmul.f32 %v924, %v926
    %v928 = vadd.f32 %v924, %v927
    %vm929 = vweird.f32 %v923
    %vm930 = vweird.f32 %v924
    %vm931 = vmor %vm929, %vm930
    %v932 = vsel %vm931, %v924, %v928
    %v933 = vand.u32 2147483647, %v923
    %vm934 = vcmp.eq.f32.partialorder %v933, 8.507059e+37
    %v935 = vand.u32 %v923, 2147483648
    %v936 = vor.u32 1.1754944e-38, %v935
    %v937 = vsel %vm934, %v936, %v932
    %v938 = vmul.f32 1.0, %v937
    %v939 = vmul.f32 %v918, %v834
    %v940 = vmul.f32 %v918, 2.0
    %v941 = vsub.f32 %v940, 1.0
    %943 = vrot.lane.b32.xlu0 %v941, 64
    %v944 = vpop.permute.xlu0 %943
    %v946 = vmul.f32 %v918, %v944
    %948 = vrot.lane.b32.xlu0 %v946, 32
    %v949 = vpop.permute.xlu0 %948
    %v951 = vadd.f32 %v939, %v949
    %v952 = vtanh.pop %v951
    %954 = vrot.lane.b32.xlu0 %v952, 64
    %v955 = vpop.permute.xlu0 %954
    %v957 = vmul.f32 %v918, %v955
    %v958 = vmul.f32 %v938, %v853
    %v959 = vmul.f32 %v938, 2.0
    %v960 = vsub.f32 %v959, 1.0
    %962 = vrot.lane.b32.xlu0 %v960, 64
    %v963 = vpop.permute.xlu0 %962
    %v965 = vmul.f32 %v938, %v963
    %967 = vrot.lane.b32.xlu0 %v965, 32
    %v968 = vpop.permute.xlu0 %967
    %v970 = vadd.f32 %v958, %v968
    %v971 = vtanh.pop %v970
    %973 = vrot.lane.b32.xlu0 %v971, 64
    %v974 = vpop.permute.xlu0 %973
    %v976 = vmul.f32 %v938, %v974
    %978 = vrot.lane.b32.xlu0 %v957, 32
    %v979 = vpop.permute.xlu0 %978
    %982 = vrot.lane.b32.xlu0 %v976, 64
    %v983 = vpop.permute.xlu0 %982
    %v985 = vsel %vm231, %v979, %v983
    %v986 = vpack.c.bf16 %v985, %v985
    %v988 = vsel %vm165, %v986, 0
    %990 = vmatpush.bf16.msra.mxu0 0
    %991 = vmatpush.bf16.msra.mxu0 0
    %992 = vmatpush.bf16.msra.mxu0 0
    %993 = vmatpush.bf16.msra.mxu0 0
    %994 = vmatpush.bf16.msra.mxu0 %v509
    %995 = vmatpush.bf16.msra.mxu0 %v507
    %996 = vmatpush.bf16.msra.mxu0 %v505
    %997 = vmatpush.bf16.msra.mxu0 %v503
    %998 = vmatmul.bf16.gmra.mxu0 %v988
    %v999 = vpop.f32.mrf.mxu0
    %v1000 = vadd.f32 0.0, %v999
    %v1001 = vpop.f32.mrf.mxu0
    %1002 = vdwg.mxu0
    %1003 = vmatpush.bf16.msra.mxu0 0
    %1004 = vmatpush.bf16.msra.mxu0 0
    %1005 = vmatpush.bf16.msra.mxu0 0
    %1006 = vmatpush.bf16.msra.mxu0 0
    %1007 = vmatpush.bf16.msra.mxu0 %v510
    %1008 = vmatpush.bf16.msra.mxu0 %v508
    %1009 = vmatpush.bf16.msra.mxu0 %v506
    %1010 = vmatpush.bf16.msra.mxu0 %v504
    %1011 = vmatmul.bf16.gmra.mxu0 %v988
    %v1012 = vpop.f32.mrf.mxu0
    %v1013 = vadd.f32 0.0, %v1012
    %v1014 = vpop.f32.mrf.mxu0
    %1015 = vdwg.mxu0
    %v1016 = vadd.f32 %v1000, %v349
    %v1017 = vxor.u32 %v1016, 2147483648
    %v1018 = vmul.f32 %v1017, 1.442695
    %v1019 = vpow.pop %v1018
    %v1020 = vadd.f32 %v1019, 1.0
    %v1021 = vrcp.pop %v1020
    %v1022 = vmul.f32 %v1020, %v1021
    %v1023 = vsub.f32 1.0, %v1022
    %v1024 = vmul.f32 %v1021, %v1023
    %v1025 = vadd.f32 %v1021, %v1024
    %vm1026 = vweird.f32 %v1020
    %vm1027 = vweird.f32 %v1021
    %vm1028 = vmor %vm1026, %vm1027
    %v1029 = vsel %vm1028, %v1021, %v1025
    %v1030 = vand.u32 2147483647, %v1020
    %vm1031 = vcmp.eq.f32.partialorder %v1030, 8.507059e+37
    %v1032 = vand.u32 %v1020, 2147483648
    %v1033 = vor.u32 1.1754944e-38, %v1032
    %v1034 = vsel %vm1031, %v1033, %v1029
    %v1035 = vmul.f32 1.0, %v1034
    %v1036 = vadd.f32 %v1013, %v371
    %v1037 = vxor.u32 %v1036, 2147483648
    %v1038 = vmul.f32 %v1037, 1.442695
    %v1039 = vpow.pop %v1038
    %v1040 = vadd.f32 %v1039, 1.0
    %v1041 = vrcp.pop %v1040
    %v1042 = vmul.f32 %v1040, %v1041
    %v1043 = vsub.f32 1.0, %v1042
    %v1044 = vmul.f32 %v1041, %v1043
    %v1045 = vadd.f32 %v1041, %v1044
    %vm1046 = vweird.f32 %v1040
    %vm1047 = vweird.f32 %v1041
    %vm1048 = vmor %vm1046, %vm1047
    %v1049 = vsel %vm1048, %v1041, %v1045
    %v1050 = vand.u32 2147483647, %v1040
    %vm1051 = vcmp.eq.f32.partialorder %v1050, 8.507059e+37
    %v1052 = vand.u32 %v1040, 2147483648
    %v1053 = vor.u32 1.1754944e-38, %v1052
    %v1054 = vsel %vm1051, %v1053, %v1049
    %v1055 = vmul.f32 1.0, %v1054
    %v1056 = vmul.f32 %v1035, %v951
    %v1057 = vmul.f32 %v1035, 2.0
    %v1058 = vsub.f32 %v1057, 1.0
    %1060 = vrot.lane.b32.xlu0 %v1058, 64
    %v1061 = vpop.permute.xlu0 %1060
    %v1063 = vmul.f32 %v1035, %v1061
    %1065 = vrot.lane.b32.xlu0 %v1063, 32
    %v1066 = vpop.permute.xlu0 %1065
    %v1068 = vadd.f32 %v1056, %v1066
    %v1069 = vtanh.pop %v1068
    %1071 = vrot.lane.b32.xlu0 %v1069, 64
    %v1072 = vpop.permute.xlu0 %1071
    %v1074 = vmul.f32 %v1035, %v1072
    %v1075 = vmul.f32 %v1055, %v970
    %v1076 = vmul.f32 %v1055, 2.0
    %v1077 = vsub.f32 %v1076, 1.0
    %1079 = vrot.lane.b32.xlu0 %v1077, 64
    %v1080 = vpop.permute.xlu0 %1079
    %v1082 = vmul.f32 %v1055, %v1080
    %1084 = vrot.lane.b32.xlu0 %v1082, 32
    %v1085 = vpop.permute.xlu0 %1084
    %v1087 = vadd.f32 %v1075, %v1085
    %v1088 = vtanh.pop %v1087
    %1090 = vrot.lane.b32.xlu0 %v1088, 64
    %v1091 = vpop.permute.xlu0 %1090
    %v1093 = vmul.f32 %v1055, %v1091
    %1095 = vrot.lane.b32.xlu0 %v1074, 32
    %v1096 = vpop.permute.xlu0 %1095
    %1099 = vrot.lane.b32.xlu0 %v1093, 64
    %v1100 = vpop.permute.xlu0 %1099
    %v1102 = vsel %vm231, %v1096, %v1100
    %v1103 = vpack.c.bf16 %v1102, %v1102
    %v1105 = vsel %vm165, %v1103, 0
    %1107 = vmatpush.bf16.msra.mxu0 0
    %1108 = vmatpush.bf16.msra.mxu0 0
    %1109 = vmatpush.bf16.msra.mxu0 0
    %1110 = vmatpush.bf16.msra.mxu0 0
    %1111 = vmatpush.bf16.msra.mxu0 %v509
    %1112 = vmatpush.bf16.msra.mxu0 %v507
    %1113 = vmatpush.bf16.msra.mxu0 %v505
    %1114 = vmatpush.bf16.msra.mxu0 %v503
    %1115 = vmatmul.bf16.gmra.mxu0 %v1105
    %v1116 = vpop.f32.mrf.mxu0
    %v1117 = vadd.f32 0.0, %v1116
    %v1118 = vpop.f32.mrf.mxu0
    %1119 = vdwg.mxu0
    %1120 = vmatpush.bf16.msra.mxu0 0
    %1121 = vmatpush.bf16.msra.mxu0 0
    %1122 = vmatpush.bf16.msra.mxu0 0
    %1123 = vmatpush.bf16.msra.mxu0 0
    %1124 = vmatpush.bf16.msra.mxu0 %v510
    %1125 = vmatpush.bf16.msra.mxu0 %v508
    %1126 = vmatpush.bf16.msra.mxu0 %v506
    %1127 = vmatpush.bf16.msra.mxu0 %v504
    %1128 = vmatmul.bf16.gmra.mxu0 %v1105
    %v1129 = vpop.f32.mrf.mxu0
    %v1130 = vadd.f32 0.0, %v1129
    %v1131 = vpop.f32.mrf.mxu0
    %1132 = vdwg.mxu0
    %v1133 = vadd.f32 %v1117, %v352
    %v1134 = vxor.u32 %v1133, 2147483648
    %v1135 = vmul.f32 %v1134, 1.442695
    %v1136 = vpow.pop %v1135
    %v1137 = vadd.f32 %v1136, 1.0
    %v1138 = vrcp.pop %v1137
    %v1139 = vmul.f32 %v1137, %v1138
    %v1140 = vsub.f32 1.0, %v1139
    %v1141 = vmul.f32 %v1138, %v1140
    %v1142 = vadd.f32 %v1138, %v1141
    %vm1143 = vweird.f32 %v1137
    %vm1144 = vweird.f32 %v1138
    %vm1145 = vmor %vm1143, %vm1144
    %v1146 = vsel %vm1145, %v1138, %v1142
    %v1147 = vand.u32 2147483647, %v1137
    %vm1148 = vcmp.eq.f32.partialorder %v1147, 8.507059e+37
    %v1149 = vand.u32 %v1137, 2147483648
    %v1150 = vor.u32 1.1754944e-38, %v1149
    %v1151 = vsel %vm1148, %v1150, %v1146
    %v1152 = vmul.f32 1.0, %v1151
    %v1153 = vadd.f32 %v1130, %v368
    %v1154 = vxor.u32 %v1153, 2147483648
    %v1155 = vmul.f32 %v1154, 1.442695
    %v1156 = vpow.pop %v1155
    %v1157 = vadd.f32 %v1156, 1.0
    %v1158 = vrcp.pop %v1157
    %v1159 = vmul.f32 %v1157, %v1158
    %v1160 = vsub.f32 1.0, %v1159
    %v1161 = vmul.f32 %v1158, %v1160
    %v1162 = vadd.f32 %v1158, %v1161
    %vm1163 = vweird.f32 %v1157
    %vm1164 = vweird.f32 %v1158
    %vm1165 = vmor %vm1163, %vm1164
    %v1166 = vsel %vm1165, %v1158, %v1162
    %v1167 = vand.u32 2147483647, %v1157
    %vm1168 = vcmp.eq.f32.partialorder %v1167, 8.507059e+37
    %v1169 = vand.u32 %v1157, 2147483648
    %v1170 = vor.u32 1.1754944e-38, %v1169
    %v1171 = vsel %vm1168, %v1170, %v1166
    %v1172 = vmul.f32 1.0, %v1171
    %v1173 = vmul.f32 %v1152, %v1068
    %v1174 = vmul.f32 %v1152, 2.0
    %v1175 = vsub.f32 %v1174, 1.0
    %1177 = vrot.lane.b32.xlu0 %v1175, 64
    %v1178 = vpop.permute.xlu0 %1177
    %v1180 = vmul.f32 %v1152, %v1178
    %1182 = vrot.lane.b32.xlu0 %v1180, 32
    %v1183 = vpop.permute.xlu0 %1182
    %v1185 = vadd.f32 %v1173, %v1183
    %v1186 = vtanh.pop %v1185
    %1188 = vrot.lane.b32.xlu0 %v1186, 64
    %v1189 = vpop.permute.xlu0 %1188
    %v1191 = vmul.f32 %v1152, %v1189
    %v1192 = vmul.f32 %v1172, %v1087
    %v1193 = vmul.f32 %v1172, 2.0
    %v1194 = vsub.f32 %v1193, 1.0
    %1196 = vrot.lane.b32.xlu0 %v1194, 64
    %v1197 = vpop.permute.xlu0 %1196
    %v1199 = vmul.f32 %v1172, %v1197
    %1201 = vrot.lane.b32.xlu0 %v1199, 32
    %v1202 = vpop.permute.xlu0 %1201
    %v1204 = vadd.f32 %v1192, %v1202
    %v1205 = vtanh.pop %v1204
    %1207 = vrot.lane.b32.xlu0 %v1205, 64
    %v1208 = vpop.permute.xlu0 %1207
    %v1210 = vmul.f32 %v1172, %v1208
    %1212 = vrot.lane.b32.xlu0 %v1191, 32
    %v1213 = vpop.permute.xlu0 %1212
    %1216 = vrot.lane.b32.xlu0 %v1210, 64
    %v1217 = vpop.permute.xlu0 %1216
    %v1219 = vsel %vm231, %v1213, %v1217
    %v1220 = vpack.c.bf16 %v1219, %v1219
    %v1222 = vsel %vm165, %v1220, 0
    %1224 = vmatpush.bf16.msra.mxu0 0
    %1225 = vmatpush.bf16.msra.mxu0 0
    %1226 = vmatpush.bf16.msra.mxu0 0
    %1227 = vmatpush.bf16.msra.mxu0 0
    %1228 = vmatpush.bf16.msra.mxu0 %v509
    %1229 = vmatpush.bf16.msra.mxu0 %v507
    %1230 = vmatpush.bf16.msra.mxu0 %v505
    %1231 = vmatpush.bf16.msra.mxu0 %v503
    %1232 = vmatmul.bf16.gmra.mxu0 %v1222
    %v1233 = vpop.f32.mrf.mxu0
    %v1234 = vadd.f32 0.0, %v1233
    %v1235 = vpop.f32.mrf.mxu0
    %1236 = vdwg.mxu0
    %1237 = vmatpush.bf16.msra.mxu0 0
    %1238 = vmatpush.bf16.msra.mxu0 0
    %1239 = vmatpush.bf16.msra.mxu0 0
    %1240 = vmatpush.bf16.msra.mxu0 0
    %1241 = vmatpush.bf16.msra.mxu0 %v510
    %1242 = vmatpush.bf16.msra.mxu0 %v508
    %1243 = vmatpush.bf16.msra.mxu0 %v506
    %1244 = vmatpush.bf16.msra.mxu0 %v504
    %1245 = vmatmul.bf16.gmra.mxu0 %v1222
    %v1246 = vpop.f32.mrf.mxu0
    %v1247 = vadd.f32 0.0, %v1246
    %v1248 = vpop.f32.mrf.mxu0
    %1249 = vdwg.mxu0
    %v1250 = vadd.f32 %v1234, %v354
    %v1251 = vxor.u32 %v1250, 2147483648
    %v1252 = vmul.f32 %v1251, 1.442695
    %v1253 = vpow.pop %v1252
    %v1254 = vadd.f32 %v1253, 1.0
    %v1255 = vrcp.pop %v1254
    %v1256 = vmul.f32 %v1254, %v1255
    %v1257 = vsub.f32 1.0, %v1256
    %v1258 = vmul.f32 %v1255, %v1257
    %v1259 = vadd.f32 %v1255, %v1258
    %vm1260 = vweird.f32 %v1254
    %vm1261 = vweird.f32 %v1255
    %vm1262 = vmor %vm1260, %vm1261
    %v1263 = vsel %vm1262, %v1255, %v1259
    %v1264 = vand.u32 2147483647, %v1254
    %vm1265 = vcmp.eq.f32.partialorder %v1264, 8.507059e+37
    %v1266 = vand.u32 %v1254, 2147483648
    %v1267 = vor.u32 1.1754944e-38, %v1266
    %v1268 = vsel %vm1265, %v1267, %v1263
    %v1269 = vmul.f32 1.0, %v1268
    %v1270 = vadd.f32 %v1247, %v366
    %v1271 = vxor.u32 %v1270, 2147483648
    %v1272 = vmul.f32 %v1271, 1.442695
    %v1273 = vpow.pop %v1272
    %v1274 = vadd.f32 %v1273, 1.0
    %v1275 = vrcp.pop %v1274
    %v1276 = vmul.f32 %v1274, %v1275
    %v1277 = vsub.f32 1.0, %v1276
    %v1278 = vmul.f32 %v1275, %v1277
    %v1279 = vadd.f32 %v1275, %v1278
    %vm1280 = vweird.f32 %v1274
    %vm1281 = vweird.f32 %v1275
    %vm1282 = vmor %vm1280, %vm1281
    %v1283 = vsel %vm1282, %v1275, %v1279
    %v1284 = vand.u32 2147483647, %v1274
    %vm1285 = vcmp.eq.f32.partialorder %v1284, 8.507059e+37
    %v1286 = vand.u32 %v1274, 2147483648
    %v1287 = vor.u32 1.1754944e-38, %v1286
    %v1288 = vsel %vm1285, %v1287, %v1283
    %v1289 = vmul.f32 1.0, %v1288
    %v1290 = vmul.f32 %v1269, %v1185
    %v1291 = vmul.f32 %v1269, 2.0
    %v1292 = vsub.f32 %v1291, 1.0
    %1294 = vrot.lane.b32.xlu0 %v1292, 64
    %v1295 = vpop.permute.xlu0 %1294
    %v1297 = vmul.f32 %v1269, %v1295
    %1299 = vrot.lane.b32.xlu0 %v1297, 32
    %v1300 = vpop.permute.xlu0 %1299
    %v1302 = vadd.f32 %v1290, %v1300
    %v1303 = vtanh.pop %v1302
    %1305 = vrot.lane.b32.xlu0 %v1303, 64
    %v1306 = vpop.permute.xlu0 %1305
    %v1308 = vmul.f32 %v1269, %v1306
    %v1309 = vmul.f32 %v1289, %v1204
    %v1310 = vmul.f32 %v1289, 2.0
    %v1311 = vsub.f32 %v1310, 1.0
    %1313 = vrot.lane.b32.xlu0 %v1311, 64
    %v1314 = vpop.permute.xlu0 %1313
    %v1316 = vmul.f32 %v1289, %v1314
    %1318 = vrot.lane.b32.xlu0 %v1316, 32
    %v1319 = vpop.permute.xlu0 %1318
    %v1321 = vadd.f32 %v1309, %v1319
    %v1322 = vtanh.pop %v1321
    %1324 = vrot.lane.b32.xlu0 %v1322, 64
    %v1325 = vpop.permute.xlu0 %1324
    %v1327 = vmul.f32 %v1289, %v1325
    %1329 = vrot.lane.b32.xlu0 %v1308, 32
    %v1330 = vpop.permute.xlu0 %1329
    %1333 = vrot.lane.b32.xlu0 %v1327, 64
    %v1334 = vpop.permute.xlu0 %1333
    %v1336 = vsel %vm231, %v1330, %v1334
    %v1337 = vpack.c.bf16 %v1336, %v1336
    %v1338 = vld [vmem:[%s7] sm:$0xf]
    %v1339 = vld [vmem:[%s7 + $0x4] sm:$0xf]
    %v1340 = vld [vmem:[%s7 + $0x8] sm:$0xf]
    %v1341 = vld [vmem:[%s7 + $0xc] sm:$0xf]
    %v1342 = vld [vmem:[%s7 + $0x10] sm:$0xf]
    %v1343 = vld [vmem:[%s7 + $0x14] sm:$0xf]
    %v1344 = vld [vmem:[%s7 + $0x18] sm:$0xf]
    %v1345 = vld [vmem:[%s7 + $0x1c] sm:$0xf]
    %v1346 = vld [vmem:[%s8] sm:$0x1]
    %v1348 = vperm.slane %v1346, 0
    %v1358 = vunpack.c.l.b16 %v1338
    %v1359 = vunpack.c.l.b16 %v1339
    %v1360 = vunpack.c.l.b16 %v1340
    %v1361 = vunpack.c.l.b16 %v1341
    %v1362 = vunpack.c.l.b16 %v1342
    %v1363 = vunpack.c.l.b16 %v1343
    %v1364 = vunpack.c.l.b16 %v1344
    %v1365 = vunpack.c.l.b16 %v1345
    %v1366 = vpack.c.b16 %v1359, %v1358
    %v1367 = vpack.c.b16 %v1361, %v1360
    %v1368 = vpack.c.b16 %v1363, %v1362
    %v1369 = vpack.c.b16 %v1365, %v1364
    %v1375 = vsel %vm165, %v1337, 0
    %1377 = vmatpush.bf16.msra.mxu0 0
    %1378 = vmatpush.bf16.msra.mxu0 0
    %1379 = vmatpush.bf16.msra.mxu0 0
    %1380 = vmatpush.bf16.msra.mxu0 0
    %1381 = vmatpush.bf16.msra.mxu0 %v1369
    %1382 = vmatpush.bf16.msra.mxu0 %v1368
    %1383 = vmatpush.bf16.msra.mxu0 %v1367
    %1384 = vmatpush.bf16.msra.mxu0 %v1366
    %1385 = vmatmul.bf16.gmra.mxu0 %v1375
    %v1386 = vpop.f32.mrf.mxu0
    %v1387 = vadd.f32 %v1348, %v1386
    %v1388 = vpop.f32.mrf.mxu0
    %1389 = vdwg.mxu0
    %v1390 = vmax.f32 %v1387, 0.0
    %v1391 = vpack.c.bf16 %v1390, %v1390
    %v1392 = vld [vmem:[#allocation4] sm:$0xf]
    %v1393 = vld [vmem:[#allocation4 + $0x4] sm:$0xf]
    %v1394 = vld [vmem:[#allocation4 + $0x8] sm:$0xf]
    %v1395 = vld [vmem:[#allocation4 + $0xc] sm:$0xf]
    %v1396 = vld [vmem:[#allocation4 + $0x10] sm:$0xf]
    %v1397 = vld [vmem:[#allocation4 + $0x14] sm:$0xf]
    %v1398 = vld [vmem:[#allocation4 + $0x18] sm:$0xf]
    %v1399 = vld [vmem:[#allocation4 + $0x1c] sm:$0xf]
    %v1400 = vld [vmem:[%s10] sm:$0x1]
    %v1402 = vperm.slane %v1400, 0
    %v1412 = vunpack.c.l.b16 %v1392
    %v1413 = vunpack.c.l.b16 %v1393
    %v1414 = vunpack.c.l.b16 %v1394
    %v1415 = vunpack.c.l.b16 %v1395
    %v1416 = vunpack.c.l.b16 %v1396
    %v1417 = vunpack.c.l.b16 %v1397
    %v1418 = vunpack.c.l.b16 %v1398
    %v1419 = vunpack.c.l.b16 %v1399
    %v1420 = vpack.c.b16 %v1413, %v1412
    %v1421 = vpack.c.b16 %v1415, %v1414
    %v1422 = vpack.c.b16 %v1417, %v1416
    %v1423 = vpack.c.b16 %v1419, %v1418
    %v1429 = vsel %vm165, %v1391, 0
    %1431 = vmatpush.bf16.msra.mxu0 0
    %1432 = vmatpush.bf16.msra.mxu0 0
    %1433 = vmatpush.bf16.msra.mxu0 0
    %1434 = vmatpush.bf16.msra.mxu0 0
    %1435 = vmatpush.bf16.msra.mxu0 %v1423
    %1436 = vmatpush.bf16.msra.mxu0 %v1422
    %1437 = vmatpush.bf16.msra.mxu0 %v1421
    %1438 = vmatpush.bf16.msra.mxu0 %v1420
    %1439 = vmatmul.bf16.gmra.mxu0 %v1429
    %v1440 = vpop.f32.mrf.mxu0
    %v1441 = vadd.f32 %v1402, %v1440
    %v1442 = vpop.f32.mrf.mxu0
    %1443 = vdwg.mxu0
    %1444 = vst [vmem:[%s11] sm:$0xff] %v1441
    // Predicated region
    $region54: #{encoder_bilstm_dnn_forward.1} parent=1 // pred_check
      _
    $region55: #{encoder_bilstm_dnn_forward.1} parent=1 // pred_check_branch
      %1446 = sbr.rel (0) target = $region57
    $region56: #{encoder_bilstm_dnn_forward.1} parent=1 // pred_region
      _
    $region57: #{encoder_bilstm_dnn_forward.1} parent=1 // pred_fallthru
      _
    // Predicated region
    $region58: #{encoder_bilstm_dnn_forward.1} parent=1 // pred_check
      _
    $region59: #{encoder_bilstm_dnn_forward.1} parent=1 // pred_check_branch
      %1448 = sbr.rel (0) target = $region61
    $region60: #{encoder_bilstm_dnn_forward.1} parent=1 // pred_region
      _
    $region61: #{encoder_bilstm_dnn_forward.1} parent=1 // pred_fallthru
      _
    %1449 = vsyncpa [#allocation3], 1
    %1450 = vsyncpa [#allocation5], 1

</llo_original>
